<compile_context>
chip_gen: v5e
topology: v5e:2x2
jax: 0.10.0
libtpu: 0.0.40
codegen_flags: <defaults>
</compile_context>

<pallas_src>
import jax
import jax.numpy as jnp
from jax.experimental import pallas as pl
from jax.experimental.pallas import tpu as pltpu


# ----------------------------------------------------------------------------
# Single fused kernel
# ----------------------------------------------------------------------------
def _vgg_fused_kernel(
    x_ref,       # (bn, 18, 128) bf16  padded input rows, lane = wcol*3 + ci (rest 0)
    w1_ref,      # (384, 128)    bf16  conv1 banded weights (3 dy blocks of 128 rows)
    b1_ref,      # (1, 128)      f32   conv1 bias tiled to lane = w*8 + co
    w2_ref,      # (384, 128)    bf16  conv2 banded weights (consume uncompressed pool1 lanes)
    b2_ref,      # (1, 128)      f32   conv2 bias tiled to lane = w*16 + co
    g1_ref,      # (512, 64)     bf16  fc1 weights fused with pool2 lane-compress + NHWC flatten
    bf1_ref,     # (1, 64)       f32
    wf2_ref,     # (64, 32)      bf16
    bf2_ref,     # (1, 32)       f32
    wf3_ref,     # (32, 10)      bf16
    bf3_ref,     # (1, 10)       f32
    e_ref,       # (128, 16)     f32   avg-pool select/scale matrix (1/16 on valid lanes)
    out_ref,     # (bn, 10)      f32   logits
    emb_ref,     # (bn, 16)      f32   global-average-pool embedding
):
    f32, bf16 = jnp.float32, jnp.bfloat16
    bn = x_ref.shape[0]

    # ---- conv1 3x3 (3 -> 8) + ReLU: ONE banded matmul, output lane = w*8 + c.
    lhs1 = jnp.concatenate(
        [x_ref[:, dy:dy + 16, :].reshape(bn * 16, 128) for dy in range(3)],
        axis=1)                                                # (bn*16, 384) bf16
    c1 = jnp.dot(lhs1, w1_ref[...], preferred_element_type=f32)
    c1 = jnp.maximum(c1 + b1_ref[...], 0.0)                   # (bn*16, 128) f32

    # ---- maxpool1 2x2: H via paired-row reduce, W via lane shift + max.
    hm = jnp.max(c1.reshape(bn, 8, 2, 128), axis=2)            # (bn, 8, 128)
    hm = hm.reshape(bn * 8, 128)
    wsh = jnp.concatenate([hm[:, 8:], hm[:, :8]], axis=1)      # lane l -> l + 8
    p1 = jnp.maximum(hm, wsh).reshape(bn, 8, 128)              # valid lanes: 16k + c

    # ---- conv2 3x3 (8 -> 16) + ReLU: ONE banded matmul on uncompressed lanes.
    zrow = jnp.zeros((bn, 1, 128), f32)
    p1 = jnp.concatenate([zrow, p1, zrow], axis=1)             # (bn, 10, 128) H-padded
    lhs2 = jnp.concatenate(
        [p1[:, dy:dy + 8, :].reshape(bn * 8, 128) for dy in range(3)],
        axis=1).astype(bf16)                                   # (bn*8, 384)
    c2 = jnp.dot(lhs2, w2_ref[...], preferred_element_type=f32)
    c2 = jnp.maximum(c2 + b2_ref[...], 0.0)                    # (bn*8, 128), lane = w*16 + c

    # ---- maxpool2 2x2 (valid lanes afterwards: 32k + c).
    hm2 = jnp.max(c2.reshape(bn, 4, 2, 128), axis=2)           # (bn, 4, 128)
    hm2 = hm2.reshape(bn * 4, 128)
    wsh2 = jnp.concatenate([hm2[:, 16:], hm2[:, :16]], axis=1)
    p2 = jnp.maximum(hm2, wsh2).reshape(bn, 4, 128)

    # ---- embedding: global average pool = sublane sum + one (128,16) matmul.
    ssum = jnp.sum(p2, axis=1)                                 # (bn, 128) f32
    emb_ref[...] = jnp.dot(ssum, e_ref[...], preferred_element_type=f32)

    # ---- classifier: fc1 fused with pool2 lane compression + NHWC flatten.
    fc1_in = jnp.concatenate([p2[:, h, :] for h in range(4)], axis=1)  # (bn, 512)
    h1 = jnp.dot(fc1_in.astype(bf16), g1_ref[...], preferred_element_type=f32)
    h1 = jnp.maximum(h1 + bf1_ref[...], 0.0)
    h2 = jnp.dot(h1.astype(bf16), wf2_ref[...], preferred_element_type=f32)
    h2 = jnp.maximum(h2 + bf2_ref[...], 0.0)
    out_ref[...] = (jnp.dot(h2.astype(bf16), wf3_ref[...],
                            preferred_element_type=f32) + bf3_ref[...])


# ----------------------------------------------------------------------------
# Wrapper: layout plumbing only (padding, banded/permuted weights, batch grid)
# ----------------------------------------------------------------------------
def _band_conv1(w_hwio):
    """(3,3,3,8) HWIO -> (384,128): B[dy*128 + wcol*3 + ci, w*8 + co] = W[dy,dx,ci,co]
    with wcol = w + dx (padded input column); rows 54..127 of each dy block are 0."""
    f32 = jnp.float32
    col = jnp.arange(18)[:, None]
    out = jnp.arange(16)[None, :]
    blocks = []
    for dy in range(3):
        b = jnp.zeros((18, 3, 16, 8), f32)
        for dx in range(3):
            sel = (col == out + dx).astype(f32)                       # (18, 16)
            b = b + sel[:, None, :, None] * w_hwio[dy, dx][None, :, None, :]
        blocks.append(jnp.pad(b.reshape(54, 128), ((0, 74), (0, 0))))
    return jnp.concatenate(blocks, axis=0)                            # (384, 128)


def _band_conv2(w_hwio):
    """(3,3,8,16) HWIO -> (384,128) consuming the *uncompressed* pool1 lanes
    (lane = 16*p + ci, p = pooled col; lanes 16p+8..16p+15 are junk -> zero rows):
    B[dy*128 + 16*p + ci, w*16 + co] = W[dy,dx,ci,co] for p == w + dx - 1."""
    f32 = jnp.float32
    pcol = jnp.arange(8)[:, None]
    out = jnp.arange(8)[None, :]
    blocks = []
    for dy in range(3):
        b = jnp.zeros((8, 16, 8, 16), f32)
        for dx in range(3):
            sel = (pcol == out + dx - 1).astype(f32)                  # (8, 8)
            wpad = jnp.zeros((16, 16), f32).at[:8, :].set(w_hwio[dy, dx])
            b = b + sel[:, None, :, None] * wpad[None, :, None, :]
        blocks.append(b.reshape(128, 128))
    return jnp.concatenate(blocks, axis=0)                            # (384, 128)


@jax.jit
def vgg_forward(x_nchw, params):
    f32, bf16 = jnp.float32, jnp.bfloat16
    n = x_nchw.shape[0]
    bn = n if n <= 16 else 16                       # batch block (tunable)
    n_pad = ((n + bn - 1) // bn) * bn

    # ---- input: NCHW -> NHWC, zero-pad H/W by 1 (fuses into the DMA), merge
    # W and C into one lane axis, pad lanes to 128, cast to bf16.
    x = jnp.transpose(x_nchw, (0, 2, 3, 1)).astype(f32)               # (N,16,16,3)
    x = jnp.pad(x, ((0, n_pad - n), (1, 1), (1, 1), (0, 0)))          # (n_pad,18,18,3)
    x = x.reshape(n_pad, 18, 54)
    x = jnp.pad(x, ((0, 0), (0, 0), (0, 74))).astype(bf16)            # (n_pad,18,128)

    # ---- weights.
    w1b = _band_conv1(params["conv1_w"].astype(f32)).astype(bf16)     # (384,128)
    w2b = _band_conv2(params["conv2_w"].astype(f32)).astype(bf16)     # (384,128)
    b1t = jnp.tile(params["conv1_b"].astype(f32), 16).reshape(1, 128)
    b2t = jnp.tile(params["conv2_b"].astype(f32), 8).reshape(1, 128)

    # fc1 rows are in PyTorch NCHW-flatten order (c*16 + h*4 + w).  Permute to
    # (h, w, c) and scatter into the uncompressed pool2 lane layout
    # (lane = h*128 + 32*k + c; slot 16..31 of every 32-lane group is junk -> 0).
    wf1_nhwc = jnp.transpose(params["fc1_w"].astype(f32).reshape(16, 4, 4, 64),
                             (1, 2, 0, 3))                            # (h, w, c, out)
    g1 = jnp.stack([wf1_nhwc, jnp.zeros_like(wf1_nhwc)], axis=2)      # (4,4,2,16,64)
    g1 = g1.reshape(512, 64).astype(bf16)

    # avg-pool select/scale matrix: E[32k + c, c] = 1/16, junk lanes -> 0.
    eye = jnp.eye(16, dtype=f32) * (1.0 / 16.0)
    emat = jnp.stack([eye, jnp.zeros((16, 16), f32)], axis=0)         # (2,16,16)
    emat = jnp.tile(emat[None], (4, 1, 1, 1)).reshape(128, 16)

    wf2 = params["fc2_w"].astype(bf16)
    wf3 = params["fc3_w"].astype(bf16)
    bf1 = params["fc1_b"].astype(f32).reshape(1, 64)
    bf2 = params["fc2_b"].astype(f32).reshape(1, 32)
    bf3 = params["fc3_b"].astype(f32).reshape(1, 10)

    weight_args = (w1b, b1t, w2b, b2t, g1, bf1, wf2, bf2, wf3, bf3, emat)

    flops = 2 * n_pad * (16 * 16 * 27 * 8 + 8 * 8 * 72 * 16
                         + 256 * 64 + 64 * 32 + 32 * 10)
    bytes_accessed = int(
        x.size * x.dtype.itemsize
        + sum(a.size * a.dtype.itemsize for a in weight_args)
        + n_pad * (10 + 16) * 4)

    out, emb = pl.pallas_call(
        _vgg_fused_kernel,
        out_shape=(jax.ShapeDtypeStruct((n_pad, 10), jnp.float32),
                   jax.ShapeDtypeStruct((n_pad, 16), jnp.float32)),
        grid=(n_pad // bn,),
        in_specs=[
            pl.BlockSpec((bn, 18, 128), lambda i: (i, 0, 0)),   # padded input
            pl.BlockSpec((384, 128), lambda i: (0, 0)),         # conv1 banded w
            pl.BlockSpec((1, 128), lambda i: (0, 0)),           # conv1 bias
            pl.BlockSpec((384, 128), lambda i: (0, 0)),         # conv2 banded w
            pl.BlockSpec((1, 128), lambda i: (0, 0)),           # conv2 bias
            pl.BlockSpec((512, 64), lambda i: (0, 0)),          # fc1 (fused)
            pl.BlockSpec((1, 64), lambda i: (0, 0)),
            pl.BlockSpec((64, 32), lambda i: (0, 0)),
            pl.BlockSpec((1, 32), lambda i: (0, 0)),
            pl.BlockSpec((32, 10), lambda i: (0, 0)),
            pl.BlockSpec((1, 10), lambda i: (0, 0)),
            pl.BlockSpec((128, 16), lambda i: (0, 0)),          # avg-pool matrix
        ],
        out_specs=(pl.BlockSpec((bn, 10), lambda i: (i, 0)),
                   pl.BlockSpec((bn, 16), lambda i: (i, 0))),
        compiler_params=pltpu.CompilerParams(
            dimension_semantics=("parallel",),
            vmem_limit_bytes=32 * 1024 * 1024),
        cost_estimate=pl.CostEstimate(flops=flops, transcendentals=0,
                                      bytes_accessed=bytes_accessed),
    )(x, *weight_args)
    return out[:n], emb[:n]


# ----------------------------------------------------------------------------
# Deterministic parameter init + pure-JAX reference (correctness check)
# ----------------------------------------------------------------------------
def init_params(key):
    ks = jax.random.split(key, 5)
    p = {}
    p["conv1_w"] = 0.1 * jax.random.normal(ks[0], (3, 3, 3, 8), jnp.float32)
    p["conv1_b"] = jnp.zeros((8,), jnp.float32)
    p["conv2_w"] = 0.1 * jax.random.normal(ks[1], (3, 3, 8, 16), jnp.float32)
    p["conv2_b"] = jnp.zeros((16,), jnp.float32)
    p["fc1_w"] = 0.05 * jax.random.normal(ks[2], (16 * 4 * 4, 64), jnp.float32)
    p["fc1_b"] = jnp.zeros((64,), jnp.float32)
    p["fc2_w"] = 0.05 * jax.random.normal(ks[3], (64, 32), jnp.float32)
    p["fc2_b"] = jnp.zeros((32,), jnp.float32)
    p["fc3_w"] = 0.05 * jax.random.normal(ks[4], (32, 10), jnp.float32)
    p["fc3_b"] = jnp.zeros((10,), jnp.float32)
    return p


def _reference_forward(x_nchw, params):
    hi = jax.lax.Precision.HIGHEST
    dn = ("NHWC", "HWIO", "NHWC")
    x = jnp.transpose(x_nchw, (0, 2, 3, 1))
    x = jax.lax.conv_general_dilated(x, params["conv1_w"], (1, 1), "SAME",
                                     dimension_numbers=dn, precision=hi)
    x = jax.nn.relu(x + params["conv1_b"])
    x = jax.lax.reduce_window(x, -jnp.inf, jax.lax.max,
                              (1, 2, 2, 1), (1, 2, 2, 1), "VALID")
    x = jax.lax.conv_general_dilated(x, params["conv2_w"], (1, 1), "SAME",
                                     dimension_numbers=dn, precision=hi)
    x = jax.nn.relu(x + params["conv2_b"])
    x = jax.lax.reduce_window(x, -jnp.inf, jax.lax.max,
                              (1, 2, 2, 1), (1, 2, 2, 1), "VALID")
    feat_nchw = jnp.transpose(x, (0, 3, 1, 2))            # (N, 16, 4, 4)
    emb1 = feat_nchw.reshape(feat_nchw.shape[0], -1)      # PyTorch view order
    h = jax.nn.relu(jnp.dot(emb1, params["fc1_w"], precision=hi)
                    + params["fc1_b"])
    h = jax.nn.relu(jnp.dot(h, params["fc2_w"], precision=hi)
                    + params["fc2_b"])
    out = jnp.dot(h, params["fc3_w"], precision=hi) + params["fc3_b"]
    emb = jnp.mean(x, axis=(1, 2))
    return out, emb


if __name__ == "__main__":
    key = jax.random.PRNGKey(0)
    k_x, k_p = jax.random.split(key)
    x = jax.random.normal(k_x, (2, 3, 16, 16), jnp.float32)    # NCHW input
    params = init_params(k_p)

    output, embedding = vgg_forward(x, params)
    jax.block_until_ready((output, embedding))
    assert output.shape == (2, 10) and embedding.shape == (2, 16)

    ref_out, ref_emb = _reference_forward(x, params)
    assert jnp.allclose(output, ref_out, atol=2e-2, rtol=2e-2), (
        float(jnp.max(jnp.abs(output - ref_out))))
    assert jnp.allclose(embedding, ref_emb, atol=2e-2, rtol=2e-2), (
        float(jnp.max(jnp.abs(embedding - ref_emb))))

    print("KERNEL_OK")
</pallas_src>

<mosaic_0001>
module attributes {stable_mosaic.version = 11 : i64} {
  func.func @_vgg_fused_kernel(%arg0: i32, %arg1: memref<2x18x128xbf16, #tpu.memory_space<vmem>>, %arg2: memref<384x128xbf16, #tpu.memory_space<vmem>>, %arg3: memref<1x128xf32, #tpu.memory_space<vmem>>, %arg4: memref<384x128xbf16, #tpu.memory_space<vmem>>, %arg5: memref<1x128xf32, #tpu.memory_space<vmem>>, %arg6: memref<512x64xbf16, #tpu.memory_space<vmem>>, %arg7: memref<1x64xf32, #tpu.memory_space<vmem>>, %arg8: memref<64x32xbf16, #tpu.memory_space<vmem>>, %arg9: memref<1x32xf32, #tpu.memory_space<vmem>>, %arg10: memref<32x10xbf16, #tpu.memory_space<vmem>>, %arg11: memref<1x10xf32, #tpu.memory_space<vmem>>, %arg12: memref<128x16xf32, #tpu.memory_space<vmem>>, %arg13: memref<2x10xf32, #tpu.memory_space<vmem>>, %arg14: memref<2x16xf32, #tpu.memory_space<vmem>>) attributes {dimension_semantics = [#tpu.dimension_semantics<parallel>], iteration_bounds = array<i64: 1>, scalar_prefetch = 0 : i64, scratch_operands = 0 : i64, tpu.core_type = #tpu.core_type<tc>, window_params = [{transform_indices = @transform_0, window_bounds = array<i64: 2, 18, 128>}, {pipeline_mode = #tpu.pipeline_mode<synchronous>, transform_indices = @transform_1, window_bounds = array<i64: 384, 128>}, {pipeline_mode = #tpu.pipeline_mode<synchronous>, transform_indices = @transform_2, window_bounds = array<i64: 1, 128>}, {pipeline_mode = #tpu.pipeline_mode<synchronous>, transform_indices = @transform_3, window_bounds = array<i64: 384, 128>}, {pipeline_mode = #tpu.pipeline_mode<synchronous>, transform_indices = @transform_4, window_bounds = array<i64: 1, 128>}, {pipeline_mode = #tpu.pipeline_mode<synchronous>, transform_indices = @transform_5, window_bounds = array<i64: 512, 64>}, {pipeline_mode = #tpu.pipeline_mode<synchronous>, transform_indices = @transform_6, window_bounds = array<i64: 1, 64>}, {pipeline_mode = #tpu.pipeline_mode<synchronous>, transform_indices = @transform_7, window_bounds = array<i64: 64, 32>}, {pipeline_mode = #tpu.pipeline_mode<synchronous>, transform_indices = @transform_8, window_bounds = array<i64: 1, 32>}, {pipeline_mode = #tpu.pipeline_mode<synchronous>, transform_indices = @transform_9, window_bounds = array<i64: 32, 10>}, {pipeline_mode = #tpu.pipeline_mode<synchronous>, transform_indices = @transform_10, window_bounds = array<i64: 1, 10>}, {pipeline_mode = #tpu.pipeline_mode<synchronous>, transform_indices = @transform_11, window_bounds = array<i64: 128, 16>}, {transform_indices = @transform_12, window_bounds = array<i64: 2, 10>}, {transform_indices = @transform_13, window_bounds = array<i64: 2, 16>}]} {
    %c0 = arith.constant 0 : index
    %c0_0 = arith.constant 0 : index
    %c0_1 = arith.constant 0 : index
    %0 = vector.load %arg1[%c0, %c0_0, %c0_1] : memref<2x18x128xbf16, #tpu.memory_space<vmem>>, vector<2x16x128xbf16>
    %1 = vector.shape_cast %0 : vector<2x16x128xbf16> to vector<32x128xbf16>
    %c0_2 = arith.constant 0 : index
    %c1 = arith.constant 1 : index
    %c0_3 = arith.constant 0 : index
    %2 = vector.load %arg1[%c0_2, %c1, %c0_3] : memref<2x18x128xbf16, #tpu.memory_space<vmem>>, vector<2x16x128xbf16>
    %3 = vector.shape_cast %2 : vector<2x16x128xbf16> to vector<32x128xbf16>
    %c0_4 = arith.constant 0 : index
    %c2 = arith.constant 2 : index
    %c0_5 = arith.constant 0 : index
    %4 = vector.load %arg1[%c0_4, %c2, %c0_5] : memref<2x18x128xbf16, #tpu.memory_space<vmem>>, vector<2x16x128xbf16>
    %5 = vector.shape_cast %4 : vector<2x16x128xbf16> to vector<32x128xbf16>
    %6 = tpu.concatenate %1, %3, %5 in 1 : vector<32x128xbf16>, vector<32x128xbf16>, vector<32x128xbf16> -> vector<32x384xbf16>
    %c0_6 = arith.constant 0 : index
    %c0_7 = arith.constant 0 : index
    %7 = vector.load %arg2[%c0_6, %c0_7] : memref<384x128xbf16, #tpu.memory_space<vmem>>, vector<384x128xbf16>
    %cst = arith.constant dense<0.000000e+00> : vector<32x128xf32>
    %8 = tpu.matmul %6, %7, %cst {dimension_numbers = #tpu.dot_dimension_numbers<[1], [0], [0], [1], [0, 0, 1, 1], [], []>} : vector<32x384xbf16>, vector<384x128xbf16>, vector<32x128xf32> -> vector<32x128xf32>
    %c0_8 = arith.constant 0 : index
    %c0_9 = arith.constant 0 : index
    %9 = vector.load %arg3[%c0_8, %c0_9] : memref<1x128xf32, #tpu.memory_space<vmem>>, vector<1x128xf32>
    %10 = vector.broadcast %9 : vector<1x128xf32> to vector<32x128xf32>
    %11 = arith.addf %8, %10 : vector<32x128xf32>
    %cst_10 = arith.constant 0.000000e+00 : f32
    %12 = vector.broadcast %cst_10 : f32 to vector<32x128xf32>
    %13 = arith.maximumf %11, %12 : vector<32x128xf32>
    %14 = vector.shape_cast %13 : vector<32x128xf32> to vector<2x8x2x128xf32>
    %cst_11 = arith.constant dense<0xFF800000> : vector<2x8x128xf32>
    %15 = vector.multi_reduction <maximumf>, %14, %cst_11 [2] : vector<2x8x2x128xf32> to vector<2x8x128xf32>
    %16 = vector.shape_cast %15 : vector<2x8x128xf32> to vector<16x128xf32>
    %17 = vector.extract_strided_slice %16 {offsets = [0, 8], sizes = [16, 120], strides = [1, 1]} : vector<16x128xf32> to vector<16x120xf32>
    %18 = vector.extract_strided_slice %16 {offsets = [0, 0], sizes = [16, 8], strides = [1, 1]} : vector<16x128xf32> to vector<16x8xf32>
    %19 = tpu.concatenate %17, %18 in 1 : vector<16x120xf32>, vector<16x8xf32> -> vector<16x128xf32>
    %20 = arith.maximumf %16, %19 : vector<16x128xf32>
    %21 = vector.shape_cast %20 : vector<16x128xf32> to vector<2x8x128xf32>
    %cst_12 = arith.constant 0.000000e+00 : f32
    %22 = vector.broadcast %cst_12 : f32 to vector<2x1x128xf32>
    %23 = tpu.concatenate %22, %21, %22 in 1 : vector<2x1x128xf32>, vector<2x8x128xf32>, vector<2x1x128xf32> -> vector<2x10x128xf32>
    %24 = vector.extract_strided_slice %23 {offsets = [0, 0, 0], sizes = [2, 8, 128], strides = [1, 1, 1]} : vector<2x10x128xf32> to vector<2x8x128xf32>
    %25 = vector.shape_cast %24 : vector<2x8x128xf32> to vector<16x128xf32>
    %26 = vector.extract_strided_slice %23 {offsets = [0, 1, 0], sizes = [2, 8, 128], strides = [1, 1, 1]} : vector<2x10x128xf32> to vector<2x8x128xf32>
    %27 = vector.shape_cast %26 : vector<2x8x128xf32> to vector<16x128xf32>
    %28 = vector.extract_strided_slice %23 {offsets = [0, 2, 0], sizes = [2, 8, 128], strides = [1, 1, 1]} : vector<2x10x128xf32> to vector<2x8x128xf32>
    %29 = vector.shape_cast %28 : vector<2x8x128xf32> to vector<16x128xf32>
    %30 = tpu.concatenate %25, %27, %29 in 1 : vector<16x128xf32>, vector<16x128xf32>, vector<16x128xf32> -> vector<16x384xf32>
    %31 = arith.truncf %30 : vector<16x384xf32> to vector<16x384xbf16>
    %c0_13 = arith.constant 0 : index
    %c0_14 = arith.constant 0 : index
    %32 = vector.load %arg4[%c0_13, %c0_14] : memref<384x128xbf16, #tpu.memory_space<vmem>>, vector<384x128xbf16>
    %cst_15 = arith.constant dense<0.000000e+00> : vector<16x128xf32>
    %33 = tpu.matmul %31, %32, %cst_15 {dimension_numbers = #tpu.dot_dimension_numbers<[1], [0], [0], [1], [0, 0, 1, 1], [], []>} : vector<16x384xbf16>, vector<384x128xbf16>, vector<16x128xf32> -> vector<16x128xf32>
    %c0_16 = arith.constant 0 : index
    %c0_17 = arith.constant 0 : index
    %34 = vector.load %arg5[%c0_16, %c0_17] : memref<1x128xf32, #tpu.memory_space<vmem>>, vector<1x128xf32>
    %35 = vector.broadcast %34 : vector<1x128xf32> to vector<16x128xf32>
    %36 = arith.addf %33, %35 : vector<16x128xf32>
    %cst_18 = arith.constant 0.000000e+00 : f32
    %37 = vector.broadcast %cst_18 : f32 to vector<16x128xf32>
    %38 = arith.maximumf %36, %37 : vector<16x128xf32>
    %39 = vector.shape_cast %38 : vector<16x128xf32> to vector<2x4x2x128xf32>
    %cst_19 = arith.constant dense<0xFF800000> : vector<2x4x128xf32>
    %40 = vector.multi_reduction <maximumf>, %39, %cst_19 [2] : vector<2x4x2x128xf32> to vector<2x4x128xf32>
    %41 = vector.shape_cast %40 : vector<2x4x128xf32> to vector<8x128xf32>
    %42 = vector.extract_strided_slice %41 {offsets = [0, 16], sizes = [8, 112], strides = [1, 1]} : vector<8x128xf32> to vector<8x112xf32>
    %43 = vector.extract_strided_slice %41 {offsets = [0, 0], sizes = [8, 16], strides = [1, 1]} : vector<8x128xf32> to vector<8x16xf32>
    %44 = tpu.concatenate %42, %43 in 1 : vector<8x112xf32>, vector<8x16xf32> -> vector<8x128xf32>
    %45 = arith.maximumf %41, %44 : vector<8x128xf32>
    %46 = vector.shape_cast %45 : vector<8x128xf32> to vector<2x4x128xf32>
    %cst_20 = arith.constant dense<0.000000e+00> : vector<2x128xf32>
    %47 = vector.multi_reduction <add>, %46, %cst_20 [1] : vector<2x4x128xf32> to vector<2x128xf32>
    %c0_21 = arith.constant 0 : index
    %c0_22 = arith.constant 0 : index
    %48 = vector.load %arg12[%c0_21, %c0_22] : memref<128x16xf32, #tpu.memory_space<vmem>>, vector<128x16xf32>
    %cst_23 = arith.constant dense<0.000000e+00> : vector<2x16xf32>
    %49 = tpu.matmul %47, %48, %cst_23 {dimension_numbers = #tpu.dot_dimension_numbers<[1], [0], [0], [1], [0, 0, 1, 1], [], []>} : vector<2x128xf32>, vector<128x16xf32>, vector<2x16xf32> -> vector<2x16xf32>
    %c0_24 = arith.constant 0 : index
    %c0_25 = arith.constant 0 : index
    %50 = vector.load %arg14[%c0_24, %c0_25] : memref<2x16xf32, #tpu.memory_space<vmem>>, vector<2x16xf32>
    tpu.vector_store %arg14[%c0_24, %c0_25], %49 {strides = array<i32>} : memref<2x16xf32, #tpu.memory_space<vmem>>, vector<2x16xf32>,
    %51 = vector.extract_strided_slice %46 {offsets = [0, 0, 0], sizes = [2, 1, 128], strides = [1, 1, 1]} : vector<2x4x128xf32> to vector<2x1x128xf32>
    %52 = vector.shape_cast %51 : vector<2x1x128xf32> to vector<2x128xf32>
    %53 = vector.extract_strided_slice %46 {offsets = [0, 1, 0], sizes = [2, 1, 128], strides = [1, 1, 1]} : vector<2x4x128xf32> to vector<2x1x128xf32>
    %54 = vector.shape_cast %53 : vector<2x1x128xf32> to vector<2x128xf32>
    %55 = vector.extract_strided_slice %46 {offsets = [0, 2, 0], sizes = [2, 1, 128], strides = [1, 1, 1]} : vector<2x4x128xf32> to vector<2x1x128xf32>
    %56 = vector.shape_cast %55 : vector<2x1x128xf32> to vector<2x128xf32>
    %57 = vector.extract_strided_slice %46 {offsets = [0, 3, 0], sizes = [2, 1, 128], strides = [1, 1, 1]} : vector<2x4x128xf32> to vector<2x1x128xf32>
    %58 = vector.shape_cast %57 : vector<2x1x128xf32> to vector<2x128xf32>
    %59 = tpu.concatenate %52, %54, %56, %58 in 1 : vector<2x128xf32>, vector<2x128xf32>, vector<2x128xf32>, vector<2x128xf32> -> vector<2x512xf32>
    %60 = arith.truncf %59 : vector<2x512xf32> to vector<2x512xbf16>
    %c0_26 = arith.constant 0 : index
    %c0_27 = arith.constant 0 : index
    %61 = vector.load %arg6[%c0_26, %c0_27] : memref<512x64xbf16, #tpu.memory_space<vmem>>, vector<512x64xbf16>
    %cst_28 = arith.constant dense<0.000000e+00> : vector<2x64xf32>
    %62 = tpu.matmul %60, %61, %cst_28 {dimension_numbers = #tpu.dot_dimension_numbers<[1], [0], [0], [1], [0, 0, 1, 1], [], []>} : vector<2x512xbf16>, vector<512x64xbf16>, vector<2x64xf32> -> vector<2x64xf32>
    %c0_29 = arith.constant 0 : index
    %c0_30 = arith.constant 0 : index
    %63 = vector.load %arg7[%c0_29, %c0_30] : memref<1x64xf32, #tpu.memory_space<vmem>>, vector<1x64xf32>
    %64 = vector.broadcast %63 : vector<1x64xf32> to vector<2x64xf32>
    %65 = arith.addf %62, %64 : vector<2x64xf32>
    %cst_31 = arith.constant 0.000000e+00 : f32
    %66 = vector.broadcast %cst_31 : f32 to vector<2x64xf32>
    %67 = arith.maximumf %65, %66 : vector<2x64xf32>
    %68 = arith.truncf %67 : vector<2x64xf32> to vector<2x64xbf16>
    %c0_32 = arith.constant 0 : index
    %c0_33 = arith.constant 0 : index
    %69 = vector.load %arg8[%c0_32, %c0_33] : memref<64x32xbf16, #tpu.memory_space<vmem>>, vector<64x32xbf16>
    %cst_34 = arith.constant dense<0.000000e+00> : vector<2x32xf32>
    %70 = tpu.matmul %68, %69, %cst_34 {dimension_numbers = #tpu.dot_dimension_numbers<[1], [0], [0], [1], [0, 0, 1, 1], [], []>} : vector<2x64xbf16>, vector<64x32xbf16>, vector<2x32xf32> -> vector<2x32xf32>
    %c0_35 = arith.constant 0 : index
    %c0_36 = arith.constant 0 : index
    %71 = vector.load %arg9[%c0_35, %c0_36] : memref<1x32xf32, #tpu.memory_space<vmem>>, vector<1x32xf32>
    %72 = vector.broadcast %71 : vector<1x32xf32> to vector<2x32xf32>
    %73 = arith.addf %70, %72 : vector<2x32xf32>
    %cst_37 = arith.constant 0.000000e+00 : f32
    %74 = vector.broadcast %cst_37 : f32 to vector<2x32xf32>
    %75 = arith.maximumf %73, %74 : vector<2x32xf32>
    %76 = arith.truncf %75 : vector<2x32xf32> to vector<2x32xbf16>
    %c0_38 = arith.constant 0 : index
    %c0_39 = arith.constant 0 : index
    %77 = vector.load %arg10[%c0_38, %c0_39] : memref<32x10xbf16, #tpu.memory_space<vmem>>, vector<32x10xbf16>
    %cst_40 = arith.constant dense<0.000000e+00> : vector<2x10xf32>
    %78 = tpu.matmul %76, %77, %cst_40 {dimension_numbers = #tpu.dot_dimension_numbers<[1], [0], [0], [1], [0, 0, 1, 1], [], []>} : vector<2x32xbf16>, vector<32x10xbf16>, vector<2x10xf32> -> vector<2x10xf32>
    %c0_41 = arith.constant 0 : index
    %c0_42 = arith.constant 0 : index
    %79 = vector.load %arg11[%c0_41, %c0_42] : memref<1x10xf32, #tpu.memory_space<vmem>>, vector<1x10xf32>
    %80 = vector.broadcast %79 : vector<1x10xf32> to vector<2x10xf32>
    %81 = arith.addf %78, %80 : vector<2x10xf32>
    %c0_43 = arith.constant 0 : index
    %c0_44 = arith.constant 0 : index
    %82 = vector.load %arg13[%c0_43, %c0_44] : memref<2x10xf32, #tpu.memory_space<vmem>>, vector<2x10xf32>
    tpu.vector_store %arg13[%c0_43, %c0_44], %81 {strides = array<i32>} : memref<2x10xf32, #tpu.memory_space<vmem>>, vector<2x10xf32>,
    return
  }
  func.func @transform_0(%arg0: i32) -> (i32, i32, i32) {
    %c0_i32 = arith.constant 0 : i32
    %c0_i32_0 = arith.constant 0 : i32
    %c0_i32_1 = arith.constant 0 : i32
    return %arg0, %c0_i32, %c0_i32_0 : i32, i32, i32
  }
  func.func @transform_1(%arg0: i32) -> (i32, i32) {
    %c0_i32 = arith.constant 0 : i32
    %c0_i32_0 = arith.constant 0 : i32
    %c0_i32_1 = arith.constant 0 : i32
    return %c0_i32, %c0_i32_0 : i32, i32
  }
  func.func @transform_2(%arg0: i32) -> (i32, i32) {
    %c0_i32 = arith.constant 0 : i32
    %c0_i32_0 = arith.constant 0 : i32
    %c0_i32_1 = arith.constant 0 : i32
    return %c0_i32, %c0_i32_0 : i32, i32
  }
  func.func @transform_3(%arg0: i32) -> (i32, i32) {
    %c0_i32 = arith.constant 0 : i32
    %c0_i32_0 = arith.constant 0 : i32
    %c0_i32_1 = arith.constant 0 : i32
    return %c0_i32, %c0_i32_0 : i32, i32
  }
  func.func @transform_4(%arg0: i32) -> (i32, i32) {
    %c0_i32 = arith.constant 0 : i32
    %c0_i32_0 = arith.constant 0 : i32
    %c0_i32_1 = arith.constant 0 : i32
    return %c0_i32, %c0_i32_0 : i32, i32
  }
  func.func @transform_5(%arg0: i32) -> (i32, i32) {
    %c0_i32 = arith.constant 0 : i32
    %c0_i32_0 = arith.constant 0 : i32
    %c0_i32_1 = arith.constant 0 : i32
    return %c0_i32, %c0_i32_0 : i32, i32
  }
  func.func @transform_6(%arg0: i32) -> (i32, i32) {
    %c0_i32 = arith.constant 0 : i32
    %c0_i32_0 = arith.constant 0 : i32
    %c0_i32_1 = arith.constant 0 : i32
    return %c0_i32, %c0_i32_0 : i32, i32
  }
  func.func @transform_7(%arg0: i32) -> (i32, i32) {
    %c0_i32 = arith.constant 0 : i32
    %c0_i32_0 = arith.constant 0 : i32
    %c0_i32_1 = arith.constant 0 : i32
    return %c0_i32, %c0_i32_0 : i32, i32
  }
  func.func @transform_8(%arg0: i32) -> (i32, i32) {
    %c0_i32 = arith.constant 0 : i32
    %c0_i32_0 = arith.constant 0 : i32
    %c0_i32_1 = arith.constant 0 : i32
    return %c0_i32, %c0_i32_0 : i32, i32
  }
  func.func @transform_9(%arg0: i32) -> (i32, i32) {
    %c0_i32 = arith.constant 0 : i32
    %c0_i32_0 = arith.constant 0 : i32
    %c0_i32_1 = arith.constant 0 : i32
    return %c0_i32, %c0_i32_0 : i32, i32
  }
  func.func @transform_10(%arg0: i32) -> (i32, i32) {
    %c0_i32 = arith.constant 0 : i32
    %c0_i32_0 = arith.constant 0 : i32
    %c0_i32_1 = arith.constant 0 : i32
    return %c0_i32, %c0_i32_0 : i32, i32
  }
  func.func @transform_11(%arg0: i32) -> (i32, i32) {
    %c0_i32 = arith.constant 0 : i32
    %c0_i32_0 = arith.constant 0 : i32
    %c0_i32_1 = arith.constant 0 : i32
    return %c0_i32, %c0_i32_0 : i32, i32
  }
  func.func @transform_12(%arg0: i32) -> (i32, i32) {
    %c0_i32 = arith.constant 0 : i32
    %c0_i32_0 = arith.constant 0 : i32
    return %arg0, %c0_i32 : i32, i32
  }
  func.func @transform_13(%arg0: i32) -> (i32, i32) {
    %c0_i32 = arith.constant 0 : i32
    %c0_i32_0 = arith.constant 0 : i32
    return %arg0, %c0_i32 : i32, i32
  }
}

</mosaic_0001>

<llo_original>
// kernel: tile.17
$region0: #{tile.17}
  #allocation0 [shape = 's32[1]{0}', space=sflag, size = 0x4, scoped, tag = 'scoped memory for tile.17']
  %s0 = inlined_call_operand.vmem [shape: f32[8], index: 0, kind: input, shape index: {}]
  %s1 = inlined_call_operand.vmem [shape: f32[16,8], index: 1, kind: output, shape index: {}]
  // Predicated region
  $region2: #{tile.17} parent=0 // pred_check
    _
  $region3: #{tile.17} parent=0 // pred_check_branch
    %3 = sbr.rel (0) target = $region5
  $region4: #{tile.17} parent=0 // pred_region
    _
  $region5: #{tile.17} parent=0 // pred_fallthru
    _
  %v4 = vld [vmem:[%s0] ss:$0 sm:$0xff]
  %5 = vst [vmem:[%s1] sm:$0xff] %v4
  %s6 = scalar_lea.vmem %s1, 8
  %7 = vst [vmem:[%s6] sm:$0xff] %v4

// kernel: tile.18
$region0: #{tile.18}
  %s0 = inlined_call_operand.vmem [shape: f32[16,8], index: 0, kind: input, shape index: {}]
  %s1 = inlined_call_operand.vmem [shape: f32[1,128], index: 1, kind: output, shape index: {}]
  $region1: #{tile.18} parent=0
    #allocation0 [shape = 'u8[4096]{0}', space=vmem, size = 0x1000, scoped, tag = 'scoped mem for output reshape']
    %v2 = vld [vmem:[%s0] sm:$0x1]
    %vm3 = vcmask 64512
    %4 = vst.msk [vmem:[#allocation0] sm:$0x1] %vm3, %v2
    %s5 = scalar_lea.vmem %s0, 15
    %v6 = vld [vmem:[%s5] sm:$0x1]
    %7 = vrot.lane.b32.xlu0 %v6, 120
    %v8 = vpop.permute.xlu0 %7
    %vm9 = vcmask 1048512
    %10 = vst.msk [vmem:[#allocation0] sm:$0x1] %vm9, %v8
    %s11 = scalar_lea.vmem %s0, 14
    %v12 = vld [vmem:[%s11] sm:$0x1]
    %13 = vrot.lane.b32.xlu0 %v12, 112
    %v14 = vpop.permute.xlu0 %13
    %vm15 = vcmask 982912
    %16 = vst.msk [vmem:[#allocation0] sm:$0x1] %vm15, %v14
    %s17 = scalar_lea.vmem %s0, 13
    %v18 = vld [vmem:[%s17] sm:$0x1]
    %19 = vrot.lane.b32.xlu0 %v18, 104
    %v20 = vpop.permute.xlu0 %19
    %vm21 = vcmask 917312
    %22 = vst.msk [vmem:[#allocation0] sm:$0x1] %vm21, %v20
    %s23 = scalar_lea.vmem %s0, 12
    %v24 = vld [vmem:[%s23] sm:$0x1]
    %25 = vrot.lane.b32.xlu0 %v24, 96
    %v26 = vpop.permute.xlu0 %25
    %vm27 = vcmask 851712
    %28 = vst.msk [vmem:[#allocation0] sm:$0x1] %vm27, %v26
    %s29 = scalar_lea.vmem %s0, 11
    %v30 = vld [vmem:[%s29] sm:$0x1]
    %31 = vrot.lane.b32.xlu0 %v30, 88
    %v32 = vpop.permute.xlu0 %31
    %vm33 = vcmask 786112
    %34 = vst.msk [vmem:[#allocation0] sm:$0x1] %vm33, %v32
    %s35 = scalar_lea.vmem %s0, 10
    %v36 = vld [vmem:[%s35] sm:$0x1]
    %37 = vrot.lane.b32.xlu0 %v36, 80
    %v38 = vpop.permute.xlu0 %37
    %vm39 = vcmask 720512
    %40 = vst.msk [vmem:[#allocation0] sm:$0x1] %vm39, %v38
    %s41 = scalar_lea.vmem %s0, 9
    %v42 = vld [vmem:[%s41] sm:$0x1]
    %43 = vrot.lane.b32.xlu0 %v42, 72
    %v44 = vpop.permute.xlu0 %43
    %vm45 = vcmask 654912
    %46 = vst.msk [vmem:[#allocation0] sm:$0x1] %vm45, %v44
    %s47 = scalar_lea.vmem %s0, 8
    %v48 = vld [vmem:[%s47] sm:$0x1]
    %49 = vrot.lane.b32.xlu0 %v48, 64
    %v50 = vpop.permute.xlu0 %49
    %vm51 = vcmask 589312
    %52 = vst.msk [vmem:[#allocation0] sm:$0x1] %vm51, %v50
    %s53 = scalar_lea.vmem %s0, 7
    %v54 = vld [vmem:[%s53] sm:$0x1]
    %55 = vrot.lane.b32.xlu0 %v54, 56
    %v56 = vpop.permute.xlu0 %55
    %vm57 = vcmask 523712
    %58 = vst.msk [vmem:[#allocation0] sm:$0x1] %vm57, %v56
    %s59 = scalar_lea.vmem %s0, 6
    %v60 = vld [vmem:[%s59] sm:$0x1]
    %61 = vrot.lane.b32.xlu0 %v60, 48
    %v62 = vpop.permute.xlu0 %61
    %vm63 = vcmask 458112
    %64 = vst.msk [vmem:[#allocation0] sm:$0x1] %vm63, %v62
    %s65 = scalar_lea.vmem %s0, 5
    %v66 = vld [vmem:[%s65] sm:$0x1]
    %67 = vrot.lane.b32.xlu0 %v66, 40
    %v68 = vpop.permute.xlu0 %67
    %vm69 = vcmask 392512
    %70 = vst.msk [vmem:[#allocation0] sm:$0x1] %vm69, %v68
    %s71 = scalar_lea.vmem %s0, 4
    %v72 = vld [vmem:[%s71] sm:$0x1]
    %73 = vrot.lane.b32.xlu0 %v72, 32
    %v74 = vpop.permute.xlu0 %73
    %vm75 = vcmask 326912
    %76 = vst.msk [vmem:[#allocation0] sm:$0x1] %vm75, %v74
    %s77 = scalar_lea.vmem %s0, 3
    %v78 = vld [vmem:[%s77] sm:$0x1]
    %79 = vrot.lane.b32.xlu0 %v78, 24
    %v80 = vpop.permute.xlu0 %79
    %vm81 = vcmask 261312
    %82 = vst.msk [vmem:[#allocation0] sm:$0x1] %vm81, %v80
    %s83 = scalar_lea.vmem %s0, 2
    %v84 = vld [vmem:[%s83] sm:$0x1]
    %85 = vrot.lane.b32.xlu0 %v84, 16
    %v86 = vpop.permute.xlu0 %85
    %vm87 = vcmask 195712
    %88 = vst.msk [vmem:[#allocation0] sm:$0x1] %vm87, %v86
    %s89 = scalar_lea.vmem %s0, 1
    %v90 = vld [vmem:[%s89] sm:$0x1]
    %91 = vrot.lane.b32.xlu0 %v90, 8
    %v92 = vpop.permute.xlu0 %91
    %vm93 = vcmask 130112
    %94 = vst.msk [vmem:[#allocation0] sm:$0x1] %vm93, %v92
    %s96 = ssub.s32 2, 1
    %v97 = vld [vmem:[#allocation0] sm:%s96]
    %s99 = ssub.s32 2, 1
    %100 = vst [vmem:[%s1] sm:%s99] %v97

// kernel: tile.22
$region0: #{tile.22}
  #allocation0 [shape = 's32[1]{0}', space=sflag, size = 0x4, scoped, tag = 'scoped memory for tile.22']
  %s0 = inlined_call_operand.vmem [shape: f32[16], index: 0, kind: input, shape index: {}]
  %s1 = inlined_call_operand.vmem [shape: f32[8,16], index: 1, kind: output, shape index: {}]
  // Predicated region
  $region2: #{tile.22} parent=0 // pred_check
    _
  $region3: #{tile.22} parent=0 // pred_check_branch
    %3 = sbr.rel (0) target = $region5
  $region4: #{tile.22} parent=0 // pred_region
    _
  $region5: #{tile.22} parent=0 // pred_fallthru
    _
  %v4 = vld [vmem:[%s0] ss:$0 sm:$0xff]
  %5 = vst [vmem:[%s1] sm:$0xff] %v4

// kernel: tile.23
$region0: #{tile.23}
  %s0 = inlined_call_operand.vmem [shape: f32[8,16], index: 0, kind: input, shape index: {}]
  %s1 = inlined_call_operand.vmem [shape: f32[1,128], index: 1, kind: output, shape index: {}]
  $region1: #{tile.23} parent=0
    #allocation0 [shape = 'u8[4096]{0}', space=vmem, size = 0x1000, scoped, tag = 'scoped mem for output reshape']
    %v2 = vld [vmem:[%s0] sm:$0x1]
    %vm3 = vcmask 130048
    %4 = vst.msk [vmem:[#allocation0] sm:$0x1] %vm3, %v2
    %s5 = scalar_lea.vmem %s0, 7
    %v6 = vld [vmem:[%s5] sm:$0x1]
    %7 = vrot.lane.b32.xlu0 %v6, 112
    %v8 = vpop.permute.xlu0 %7
    %vm9 = vcmask 1048448
    %10 = vst.msk [vmem:[#allocation0] sm:$0x1] %vm9, %v8
    %s11 = scalar_lea.vmem %s0, 6
    %v12 = vld [vmem:[%s11] sm:$0x1]
    %13 = vrot.lane.b32.xlu0 %v12, 96
    %v14 = vpop.permute.xlu0 %13
    %vm15 = vcmask 917248
    %16 = vst.msk [vmem:[#allocation0] sm:$0x1] %vm15, %v14
    %s17 = scalar_lea.vmem %s0, 5
    %v18 = vld [vmem:[%s17] sm:$0x1]
    %19 = vrot.lane.b32.xlu0 %v18, 80
    %v20 = vpop.permute.xlu0 %19
    %vm21 = vcmask 786048
    %22 = vst.msk [vmem:[#allocation0] sm:$0x1] %vm21, %v20
    %s23 = scalar_lea.vmem %s0, 4
    %v24 = vld [vmem:[%s23] sm:$0x1]
    %25 = vrot.lane.b32.xlu0 %v24, 64
    %v26 = vpop.permute.xlu0 %25
    %vm27 = vcmask 654848
    %28 = vst.msk [vmem:[#allocation0] sm:$0x1] %vm27, %v26
    %s29 = scalar_lea.vmem %s0, 3
    %v30 = vld [vmem:[%s29] sm:$0x1]
    %31 = vrot.lane.b32.xlu0 %v30, 48
    %v32 = vpop.permute.xlu0 %31
    %vm33 = vcmask 523648
    %34 = vst.msk [vmem:[#allocation0] sm:$0x1] %vm33, %v32
    %s35 = scalar_lea.vmem %s0, 2
    %v36 = vld [vmem:[%s35] sm:$0x1]
    %37 = vrot.lane.b32.xlu0 %v36, 32
    %v38 = vpop.permute.xlu0 %37
    %vm39 = vcmask 392448
    %40 = vst.msk [vmem:[#allocation0] sm:$0x1] %vm39, %v38
    %s41 = scalar_lea.vmem %s0, 1
    %v42 = vld [vmem:[%s41] sm:$0x1]
    %43 = vrot.lane.b32.xlu0 %v42, 16
    %v44 = vpop.permute.xlu0 %43
    %vm45 = vcmask 261248
    %46 = vst.msk [vmem:[#allocation0] sm:$0x1] %vm45, %v44
    %s48 = ssub.s32 2, 1
    %v49 = vld [vmem:[#allocation0] sm:%s48]
    %s51 = ssub.s32 2, 1
    %52 = vst [vmem:[%s1] sm:%s51] %v49

// kernel: vgg_forward.1
$region0: #{vgg_forward.1}
  #allocation0 [shape = 'u32[]', space=smem, size = 0x4, offset = 0x4, fixed_abs, tag = 'smem constant byte address 0x4 - core index']
  #allocation1 [shape = 'u32[72,128]{1,0:T(1,128)}', space=vmem, size = 0x9000, scoped, tag = 'internal scratch']
  %s0 = inlined_call_operand.vmem [shape: bf16[2,18,128], index: 0, kind: input, shape index: {}]
  %s1 = inlined_call_operand.vmem [shape: bf16[384,128], index: 1, kind: input, shape index: {}]
  %s2 = inlined_call_operand.vmem [shape: f32[1,128], index: 2, kind: input, shape index: {}]
  %s3 = inlined_call_operand.vmem [shape: bf16[384,128], index: 3, kind: input, shape index: {}]
  %s4 = inlined_call_operand.vmem [shape: f32[1,128], index: 4, kind: input, shape index: {}]
  %s5 = inlined_call_operand.vmem [shape: bf16[512,64], index: 5, kind: input, shape index: {}]
  %s6 = inlined_call_operand.vmem [shape: f32[1,64], index: 6, kind: input, shape index: {}]
  %s7 = inlined_call_operand.vmem [shape: bf16[64,32], index: 7, kind: input, shape index: {}]
  %s8 = inlined_call_operand.vmem [shape: f32[1,32], index: 8, kind: input, shape index: {}]
  %s9 = inlined_call_operand.vmem [shape: bf16[32,10], index: 9, kind: input, shape index: {}]
  %s10 = inlined_call_operand.vmem [shape: f32[1,10], index: 10, kind: input, shape index: {}]
  %s11 = inlined_call_operand.vmem [shape: f32[128,16], index: 11, kind: input, shape index: {}]
  %s12 = inlined_call_operand.hbm [shape: f32[2,10], index: 12, kind: output, shape index: {0}]
  %s13 = inlined_call_operand.hbm [shape: f32[2,16], index: 13, kind: output, shape index: {1}]
  %14 = xla_tuple %s12, %s13
  %s15 = sld [smem:[#allocation0]]
  $region66: #{vgg_forward.1} parent=0
    _
  %s17 = ssub.s32 1, %s15
  %s18 = scalar_select 0, %s17, %s15
  $region1: #{vgg_forward.1} parent=0
    #allocation2 [shape = 'u8[1024]{0}', space=vmem, size = 0x400, scoped, tag = 'output window, operand 0, single buffered']
    #allocation3 [shape = 's32[1]{0}', space=sflag, size = 0x4, scoped, tag = 'scoped memory for vgg_forward.1']
    #allocation4 [shape = 'u8[1024]{0}', space=vmem, size = 0x400, scoped, tag = 'output window, operand 1, single buffered']
    #allocation5 [shape = 's32[1]{0}', space=sflag, size = 0x4, scoped, tag = 'scoped memory for vgg_forward.1']
    %19 = vsyncpa [#allocation3], 0
    %20 = vsyncpa [#allocation5], 0
    // Predicated region
    $region2: #{vgg_forward.1} parent=1 // pred_check
      _
    $region3: #{vgg_forward.1} parent=1 // pred_check_branch
      %22 = sbr.rel (0) target = $region5
    $region4: #{vgg_forward.1} parent=1 // pred_region
      _
    $region5: #{vgg_forward.1} parent=1 // pred_fallthru
      _
    // Predicated region
    $region6: #{vgg_forward.1} parent=1 // pred_check
      _
    $region7: #{vgg_forward.1} parent=1 // pred_check_branch
      %24 = sbr.rel (0) target = $region9
    $region8: #{vgg_forward.1} parent=1 // pred_region
      _
    $region9: #{vgg_forward.1} parent=1 // pred_fallthru
      _
    // Predicated region
    $region10: #{vgg_forward.1} parent=1 // pred_check
      _
    $region11: #{vgg_forward.1} parent=1 // pred_check_branch
      %26 = sbr.rel (0) target = $region13
    $region12: #{vgg_forward.1} parent=1 // pred_region
      _
    $region13: #{vgg_forward.1} parent=1 // pred_fallthru
      _
    // Predicated region
    $region14: #{vgg_forward.1} parent=1 // pred_check
      _
    $region15: #{vgg_forward.1} parent=1 // pred_check_branch
      %28 = sbr.rel (0) target = $region17
    $region16: #{vgg_forward.1} parent=1 // pred_region
      _
    $region17: #{vgg_forward.1} parent=1 // pred_fallthru
      _
    // Predicated region
    $region18: #{vgg_forward.1} parent=1 // pred_check
      _
    $region19: #{vgg_forward.1} parent=1 // pred_check_branch
      %30 = sbr.rel (0) target = $region21
    $region20: #{vgg_forward.1} parent=1 // pred_region
      _
    $region21: #{vgg_forward.1} parent=1 // pred_fallthru
      _
    // Predicated region
    $region22: #{vgg_forward.1} parent=1 // pred_check
      _
    $region23: #{vgg_forward.1} parent=1 // pred_check_branch
      %32 = sbr.rel (0) target = $region25
    $region24: #{vgg_forward.1} parent=1 // pred_region
      _
    $region25: #{vgg_forward.1} parent=1 // pred_fallthru
      _
    // Predicated region
    $region26: #{vgg_forward.1} parent=1 // pred_check
      _
    $region27: #{vgg_forward.1} parent=1 // pred_check_branch
      %34 = sbr.rel (0) target = $region29
    $region28: #{vgg_forward.1} parent=1 // pred_region
      _
    $region29: #{vgg_forward.1} parent=1 // pred_fallthru
      _
    // Predicated region
    $region30: #{vgg_forward.1} parent=1 // pred_check
      _
    $region31: #{vgg_forward.1} parent=1 // pred_check_branch
      %36 = sbr.rel (0) target = $region33
    $region32: #{vgg_forward.1} parent=1 // pred_region
      _
    $region33: #{vgg_forward.1} parent=1 // pred_fallthru
      _
    // Predicated region
    $region34: #{vgg_forward.1} parent=1 // pred_check
      _
    $region35: #{vgg_forward.1} parent=1 // pred_check_branch
      %38 = sbr.rel (0) target = $region37
    $region36: #{vgg_forward.1} parent=1 // pred_region
      _
    $region37: #{vgg_forward.1} parent=1 // pred_fallthru
      _
    // Predicated region
    $region38: #{vgg_forward.1} parent=1 // pred_check
      _
    $region39: #{vgg_forward.1} parent=1 // pred_check_branch
      %40 = sbr.rel (0) target = $region41
    $region40: #{vgg_forward.1} parent=1 // pred_region
      _
    $region41: #{vgg_forward.1} parent=1 // pred_fallthru
      _
    // Predicated region
    $region42: #{vgg_forward.1} parent=1 // pred_check
      _
    $region43: #{vgg_forward.1} parent=1 // pred_check_branch
      %42 = sbr.rel (0) target = $region45
    $region44: #{vgg_forward.1} parent=1 // pred_region
      _
    $region45: #{vgg_forward.1} parent=1 // pred_fallthru
      _
    // Predicated region
    $region46: #{vgg_forward.1} parent=1 // pred_check
      _
    $region47: #{vgg_forward.1} parent=1 // pred_check_branch
      %44 = sbr.rel (0) target = $region49
    $region48: #{vgg_forward.1} parent=1 // pred_region
      _
    $region49: #{vgg_forward.1} parent=1 // pred_fallthru
      _
    %v46 = vld [vmem:[%s0] sm:$0xf]
    %v47 = vld [vmem:[%s0 + $0x4] sm:$0xf]
    %v48 = vld [vmem:[%s0 + $0xc] sm:$0xf]
    %v49 = vld [vmem:[%s0 + $0x10] sm:$0xf]
    %v50 = vld [vmem:[%s0 + $0x8] sm:$0x1]
    %v51 = vld [vmem:[%s0 + $0x14] sm:$0x1]
    %vm52 = vsmask.f32 3328
    %vm53 = vsmask.f32 7440
    %vm54 = vmor %vm52, %vm53
    %v56 = vshrl.u32 %v46, 16
    %v58 = vrot.slane %v56, 4
    %v59 = vshll.u32 %v46, 16
    %v61 = vrot.slane %v59, 5
    %v62 = vor.u32 %v58, %v61
    %v63 = vrot.slane %v62, 4
    %v65 = vshll.u32 %v47, 16
    %v67 = vrot.slane %v65, 5
    %v68 = vsel %vm54, %v63, %v67
    %v69 = vshrl.u32 %v47, 16
    %v71 = vrot.slane %v69, 4
    %v72 = vor.u32 %v71, %v67
    %v73 = vrot.slane %v72, 4
    %v75 = vshll.u32 %v50, 16
    %v77 = vrot.slane %v75, 5
    %v78 = vsel %vm54, %v73, %v77
    %v80 = vshrl.u32 %v48, 16
    %v82 = vrot.slane %v80, 4
    %v83 = vshll.u32 %v48, 16
    %v85 = vrot.slane %v83, 5
    %v86 = vor.u32 %v82, %v85
    %v87 = vrot.slane %v86, 4
    %v89 = vshll.u32 %v49, 16
    %v91 = vrot.slane %v89, 5
    %v92 = vsel %vm54, %v87, %v91
    %v93 = vshrl.u32 %v49, 16
    %v95 = vrot.slane %v93, 4
    %v96 = vor.u32 %v95, %v91
    %v97 = vrot.slane %v96, 4
    %v99 = vshll.u32 %v51, 16
    %v101 = vrot.slane %v99, 5
    %v102 = vsel %vm54, %v97, %v101
    %v103 = vld [vmem:[%s0] sm:$0xe]
    %v104 = vld [vmem:[%s0 + $0xc] sm:$0xe]
    %vm111 = vcmask 1042432
    %vm112 = vcmask 1046532
    %vm113 = vmor %vm111, %vm112
    %v114 = vrot.slane %v103, 5
    %v115 = vrot.slane %v114, 4
    %v116 = vrot.slane %v47, 5
    %v117 = vsel %vm113, %v115, %v116
    %v118 = vrot.slane %v116, 4
    %v119 = vrot.slane %v50, 5
    %v120 = vsel %vm113, %v118, %v119
    %v121 = vrot.slane %v104, 5
    %v122 = vrot.slane %v121, 4
    %v123 = vrot.slane %v49, 5
    %v124 = vsel %vm113, %v122, %v123
    %v125 = vrot.slane %v123, 4
    %v126 = vrot.slane %v51, 5
    %v127 = vsel %vm113, %v125, %v126
    %v130 = vunpack.c.l.b16 %v46
    %v131 = vunpack.c.l.b16 %v47
    %v132 = vunpack.c.l.b16 %v48
    %v133 = vunpack.c.l.b16 %v49
    %v134 = vpack.c.b16 %v131, %v130
    %v135 = vpack.c.b16 %v133, %v132
    %v138 = vunpack.c.l.b16 %v68
    %v139 = vunpack.c.l.b16 %v78
    %v140 = vunpack.c.l.b16 %v92
    %v141 = vunpack.c.l.b16 %v102
    %v142 = vpack.c.b16 %v139, %v138
    %v143 = vpack.c.b16 %v141, %v140
    %v146 = vunpack.c.l.b16 %v117
    %v147 = vunpack.c.l.b16 %v120
    %v148 = vunpack.c.l.b16 %v124
    %v149 = vunpack.c.l.b16 %v127
    %v150 = vpack.c.b16 %v147, %v146
    %v151 = vpack.c.b16 %v149, %v148
    %v154 = vld [vmem:[%s1] sm:$0xf]
    %v155 = vld [vmem:[%s1 + $0x4] sm:$0xf]
    %v156 = vld [vmem:[%s1 + $0x8] sm:$0xf]
    %v157 = vld [vmem:[%s1 + $0xc] sm:$0xf]
    %v158 = vld [vmem:[%s1 + $0x10] sm:$0xf]
    %v159 = vld [vmem:[%s1 + $0x14] sm:$0xf]
    %v160 = vld [vmem:[%s1 + $0x18] sm:$0xf]
    %v161 = vld [vmem:[%s1 + $0x1c] sm:$0xf]
    %v162 = vld [vmem:[%s1 + $0x20] sm:$0xf]
    %v163 = vld [vmem:[%s1 + $0x24] sm:$0xf]
    %v164 = vld [vmem:[%s1 + $0x28] sm:$0xf]
    %v165 = vld [vmem:[%s1 + $0x2c] sm:$0xf]
    %v166 = vld [vmem:[%s1 + $0x30] sm:$0xf]
    %v167 = vld [vmem:[%s1 + $0x34] sm:$0xf]
    %v168 = vld [vmem:[%s1 + $0x38] sm:$0xf]
    %v169 = vld [vmem:[%s1 + $0x3c] sm:$0xf]
    %v170 = vld [vmem:[%s1 + $0x40] sm:$0xf]
    %v171 = vld [vmem:[%s1 + $0x44] sm:$0xf]
    %v172 = vld [vmem:[%s1 + $0x48] sm:$0xf]
    %v173 = vld [vmem:[%s1 + $0x4c] sm:$0xf]
    %v174 = vld [vmem:[%s1 + $0x50] sm:$0xf]
    %v175 = vld [vmem:[%s1 + $0x54] sm:$0xf]
    %v176 = vld [vmem:[%s1 + $0x58] sm:$0xf]
    %v177 = vld [vmem:[%s1 + $0x5c] sm:$0xf]
    %v178 = vld [vmem:[%s1 + $0x60] sm:$0xf]
    %v179 = vld [vmem:[%s1 + $0x64] sm:$0xf]
    %v180 = vld [vmem:[%s1 + $0x68] sm:$0xf]
    %v181 = vld [vmem:[%s1 + $0x6c] sm:$0xf]
    %v182 = vld [vmem:[%s1 + $0x70] sm:$0xf]
    %v183 = vld [vmem:[%s1 + $0x74] sm:$0xf]
    %v184 = vld [vmem:[%s1 + $0x78] sm:$0xf]
    %v185 = vld [vmem:[%s1 + $0x7c] sm:$0xf]
    %v186 = vld [vmem:[%s1 + $0x80] sm:$0xf]
    %v187 = vld [vmem:[%s1 + $0x84] sm:$0xf]
    %v188 = vld [vmem:[%s1 + $0x88] sm:$0xf]
    %v189 = vld [vmem:[%s1 + $0x8c] sm:$0xf]
    %v190 = vld [vmem:[%s1 + $0x90] sm:$0xf]
    %v191 = vld [vmem:[%s1 + $0x94] sm:$0xf]
    %v192 = vld [vmem:[%s1 + $0x98] sm:$0xf]
    %v193 = vld [vmem:[%s1 + $0x9c] sm:$0xf]
    %v194 = vld [vmem:[%s1 + $0xa0] sm:$0xf]
    %v195 = vld [vmem:[%s1 + $0xa4] sm:$0xf]
    %v196 = vld [vmem:[%s1 + $0xa8] sm:$0xf]
    %v197 = vld [vmem:[%s1 + $0xac] sm:$0xf]
    %v198 = vld [vmem:[%s1 + $0xb0] sm:$0xf]
    %v199 = vld [vmem:[%s1 + $0xb4] sm:$0xf]
    %v200 = vld [vmem:[%s1 + $0xb8] sm:$0xf]
    %v201 = vld [vmem:[%s1 + $0xbc] sm:$0xf]
    %v202 = vld [vmem:[%s2] sm:$0x1]
    %v204 = vperm.slane %v202, 0
    %v254 = vunpack.c.l.b16 %v154
    %v255 = vunpack.c.l.b16 %v155
    %v256 = vunpack.c.l.b16 %v156
    %v257 = vunpack.c.l.b16 %v157
    %v258 = vunpack.c.l.b16 %v158
    %v259 = vunpack.c.l.b16 %v159
    %v260 = vunpack.c.l.b16 %v160
    %v261 = vunpack.c.l.b16 %v161
    %v262 = vunpack.c.l.b16 %v162
    %v263 = vunpack.c.l.b16 %v163
    %v264 = vunpack.c.l.b16 %v164
    %v265 = vunpack.c.l.b16 %v165
    %v266 = vunpack.c.l.b16 %v166
    %v267 = vunpack.c.l.b16 %v167
    %v268 = vunpack.c.l.b16 %v168
    %v269 = vunpack.c.l.b16 %v169
    %v270 = vunpack.c.l.b16 %v170
    %v271 = vunpack.c.l.b16 %v171
    %v272 = vunpack.c.l.b16 %v172
    %v273 = vunpack.c.l.b16 %v173
    %v274 = vunpack.c.l.b16 %v174
    %v275 = vunpack.c.l.b16 %v175
    %v276 = vunpack.c.l.b16 %v176
    %v277 = vunpack.c.l.b16 %v177
    %v278 = vunpack.c.l.b16 %v178
    %v279 = vunpack.c.l.b16 %v179
    %v280 = vunpack.c.l.b16 %v180
    %v281 = vunpack.c.l.b16 %v181
    %v282 = vunpack.c.l.b16 %v182
    %v283 = vunpack.c.l.b16 %v183
    %v284 = vunpack.c.l.b16 %v184
    %v285 = vunpack.c.l.b16 %v185
    %v286 = vunpack.c.l.b16 %v186
    %v287 = vunpack.c.l.b16 %v187
    %v288 = vunpack.c.l.b16 %v188
    %v289 = vunpack.c.l.b16 %v189
    %v290 = vunpack.c.l.b16 %v190
    %v291 = vunpack.c.l.b16 %v191
    %v292 = vunpack.c.l.b16 %v192
    %v293 = vunpack.c.l.b16 %v193
    %v294 = vunpack.c.l.b16 %v194
    %v295 = vunpack.c.l.b16 %v195
    %v296 = vunpack.c.l.b16 %v196
    %v297 = vunpack.c.l.b16 %v197
    %v298 = vunpack.c.l.b16 %v198
    %v299 = vunpack.c.l.b16 %v199
    %v300 = vunpack.c.l.b16 %v200
    %v301 = vunpack.c.l.b16 %v201
    %v302 = vpack.c.b16 %v255, %v254
    %v303 = vpack.c.b16 %v257, %v256
    %v304 = vpack.c.b16 %v259, %v258
    %v305 = vpack.c.b16 %v261, %v260
    %v306 = vpack.c.b16 %v263, %v262
    %v307 = vpack.c.b16 %v265, %v264
    %v308 = vpack.c.b16 %v267, %v266
    %v309 = vpack.c.b16 %v269, %v268
    %v310 = vpack.c.b16 %v271, %v270
    %v311 = vpack.c.b16 %v273, %v272
    %v312 = vpack.c.b16 %v275, %v274
    %v313 = vpack.c.b16 %v277, %v276
    %v314 = vpack.c.b16 %v279, %v278
    %v315 = vpack.c.b16 %v281, %v280
    %v316 = vpack.c.b16 %v283, %v282
    %v317 = vpack.c.b16 %v285, %v284
    %v318 = vpack.c.b16 %v287, %v286
    %v319 = vpack.c.b16 %v289, %v288
    %v320 = vpack.c.b16 %v291, %v290
    %v321 = vpack.c.b16 %v293, %v292
    %v322 = vpack.c.b16 %v295, %v294
    %v323 = vpack.c.b16 %v297, %v296
    %v324 = vpack.c.b16 %v299, %v298
    %v325 = vpack.c.b16 %v301, %v300
    %350 = vmatpush.bf16.msra.mxu0 %v309
    %351 = vmatpush.bf16.msra.mxu0 %v308
    %352 = vmatpush.bf16.msra.mxu0 %v307
    %353 = vmatpush.bf16.msra.mxu0 %v306
    %354 = vmatpush.bf16.msra.mxu0 %v305
    %355 = vmatpush.bf16.msra.mxu0 %v304
    %356 = vmatpush.bf16.msra.mxu0 %v303
    %357 = vmatpush.bf16.msra.mxu0 %v302
    %358 = vmatmul.bf16.gmra.mxu0 %v134
    %v359 = vpop.f32.mrf.mxu0
    %v360 = vadd.f32 %v204, %v359
    %v361 = vpop.f32.mrf.mxu0
    %v362 = vadd.f32 %v204, %v361
    %363 = vmatmul.bf16.gmra.mxu0 %v135
    %v364 = vpop.f32.mrf.mxu0
    %v365 = vadd.f32 %v204, %v364
    %v366 = vpop.f32.mrf.mxu0
    %v367 = vadd.f32 %v204, %v366
    %368 = vdwg.mxu0
    %369 = vmatpush.bf16.msra.mxu0 %v317
    %370 = vmatpush.bf16.msra.mxu0 %v316
    %371 = vmatpush.bf16.msra.mxu0 %v315
    %372 = vmatpush.bf16.msra.mxu0 %v314
    %373 = vmatpush.bf16.msra.mxu0 %v313
    %374 = vmatpush.bf16.msra.mxu0 %v312
    %375 = vmatpush.bf16.msra.mxu0 %v311
    %376 = vmatpush.bf16.msra.mxu0 %v310
    %377 = vmatmul.bf16.gmra.mxu0 %v142
    %v378 = vpop.f32.mrf.mxu0
    %v379 = vadd.f32 %v360, %v378
    %v380 = vpop.f32.mrf.mxu0
    %v381 = vadd.f32 %v362, %v380
    %382 = vmatmul.bf16.gmra.mxu0 %v143
    %v383 = vpop.f32.mrf.mxu0
    %v384 = vadd.f32 %v365, %v383
    %v385 = vpop.f32.mrf.mxu0
    %v386 = vadd.f32 %v367, %v385
    %387 = vdwg.mxu0
    %388 = vmatpush.bf16.msra.mxu0 %v325
    %389 = vmatpush.bf16.msra.mxu0 %v324
    %390 = vmatpush.bf16.msra.mxu0 %v323
    %391 = vmatpush.bf16.msra.mxu0 %v322
    %392 = vmatpush.bf16.msra.mxu0 %v321
    %393 = vmatpush.bf16.msra.mxu0 %v320
    %394 = vmatpush.bf16.msra.mxu0 %v319
    %395 = vmatpush.bf16.msra.mxu0 %v318
    %396 = vmatmul.bf16.gmra.mxu0 %v150
    %v397 = vpop.f32.mrf.mxu0
    %v398 = vadd.f32 %v379, %v397
    %v399 = vpop.f32.mrf.mxu0
    %v400 = vadd.f32 %v381, %v399
    %401 = vmatmul.bf16.gmra.mxu0 %v151
    %v402 = vpop.f32.mrf.mxu0
    %v403 = vadd.f32 %v384, %v402
    %v404 = vpop.f32.mrf.mxu0
    %v405 = vadd.f32 %v386, %v404
    %406 = vdwg.mxu0
    %v407 = vmax.f32 %v398, 0.0
    %v408 = vmax.f32 %v400, 0.0
    %v409 = vmax.f32 %v403, 0.0
    %v410 = vmax.f32 %v405, 0.0
    %v415 = vrot.slane %v407, 2
    %v416 = vrot.slane %v407, 4
    %v417 = vrot.slane %v407, 6
    %v418 = vrot.slane %v408, 2
    %v419 = vrot.slane %v408, 4
    %v420 = vrot.slane %v408, 6
    %v421 = vrot.slane %v409, 2
    %v422 = vrot.slane %v409, 4
    %v423 = vrot.slane %v409, 6
    %v424 = vrot.slane %v410, 2
    %v425 = vrot.slane %v410, 4
    %v426 = vrot.slane %v410, 6
    %vm439 = vcmask 1041408
    %v440 = vsel %vm439, %v407, -inf
    %v441 = vrot.slane %v440, 4
    %v442 = vmax.f32 %v440, %v441
    %v443 = vrot.slane %v442, 2
    %v444 = vmax.f32 %v442, %v443
    %v445 = vrot.slane %v444, 1
    %v446 = vmax.f32 %v444, %v445
    %v447 = vsel %vm439, %v415, -inf
    %v448 = vrot.slane %v447, 4
    %v449 = vmax.f32 %v447, %v448
    %v450 = vrot.slane %v449, 2
    %v451 = vmax.f32 %v449, %v450
    %v452 = vrot.slane %v451, 1
    %v453 = vmax.f32 %v451, %v452
    %v454 = vsel %vm439, %v416, -inf
    %v455 = vrot.slane %v454, 4
    %v456 = vmax.f32 %v454, %v455
    %v457 = vrot.slane %v456, 2
    %v458 = vmax.f32 %v456, %v457
    %v459 = vrot.slane %v458, 1
    %v460 = vmax.f32 %v458, %v459
    %v461 = vsel %vm439, %v417, -inf
    %v462 = vrot.slane %v461, 4
    %v463 = vmax.f32 %v461, %v462
    %v464 = vrot.slane %v463, 2
    %v465 = vmax.f32 %v463, %v464
    %v466 = vrot.slane %v465, 1
    %v467 = vmax.f32 %v465, %v466
    %v468 = vsel %vm439, %v408, -inf
    %v469 = vrot.slane %v468, 4
    %v470 = vmax.f32 %v468, %v469
    %v471 = vrot.slane %v470, 2
    %v472 = vmax.f32 %v470, %v471
    %v473 = vrot.slane %v472, 1
    %v474 = vmax.f32 %v472, %v473
    %v475 = vsel %vm439, %v418, -inf
    %v476 = vrot.slane %v475, 4
    %v477 = vmax.f32 %v475, %v476
    %v478 = vrot.slane %v477, 2
    %v479 = vmax.f32 %v477, %v478
    %v480 = vrot.slane %v479, 1
    %v481 = vmax.f32 %v479, %v480
    %v482 = vsel %vm439, %v419, -inf
    %v483 = vrot.slane %v482, 4
    %v484 = vmax.f32 %v482, %v483
    %v485 = vrot.slane %v484, 2
    %v486 = vmax.f32 %v484, %v485
    %v487 = vrot.slane %v486, 1
    %v488 = vmax.f32 %v486, %v487
    %v489 = vsel %vm439, %v420, -inf
    %v490 = vrot.slane %v489, 4
    %v491 = vmax.f32 %v489, %v490
    %v492 = vrot.slane %v491, 2
    %v493 = vmax.f32 %v491, %v492
    %v494 = vrot.slane %v493, 1
    %v495 = vmax.f32 %v493, %v494
    %v496 = vsel %vm439, %v409, -inf
    %v497 = vrot.slane %v496, 4
    %v498 = vmax.f32 %v496, %v497
    %v499 = vrot.slane %v498, 2
    %v500 = vmax.f32 %v498, %v499
    %v501 = vrot.slane %v500, 1
    %v502 = vmax.f32 %v500, %v501
    %v503 = vsel %vm439, %v421, -inf
    %v504 = vrot.slane %v503, 4
    %v505 = vmax.f32 %v503, %v504
    %v506 = vrot.slane %v505, 2
    %v507 = vmax.f32 %v505, %v506
    %v508 = vrot.slane %v507, 1
    %v509 = vmax.f32 %v507, %v508
    %v510 = vsel %vm439, %v422, -inf
    %v511 = vrot.slane %v510, 4
    %v512 = vmax.f32 %v510, %v511
    %v513 = vrot.slane %v512, 2
    %v514 = vmax.f32 %v512, %v513
    %v515 = vrot.slane %v514, 1
    %v516 = vmax.f32 %v514, %v515
    %v517 = vsel %vm439, %v423, -inf
    %v518 = vrot.slane %v517, 4
    %v519 = vmax.f32 %v517, %v518
    %v520 = vrot.slane %v519, 2
    %v521 = vmax.f32 %v519, %v520
    %v522 = vrot.slane %v521, 1
    %v523 = vmax.f32 %v521, %v522
    %v524 = vsel %vm439, %v410, -inf
    %v525 = vrot.slane %v524, 4
    %v526 = vmax.f32 %v524, %v525
    %v527 = vrot.slane %v526, 2
    %v528 = vmax.f32 %v526, %v527
    %v529 = vrot.slane %v528, 1
    %v530 = vmax.f32 %v528, %v529
    %v531 = vsel %vm439, %v424, -inf
    %v532 = vrot.slane %v531, 4
    %v533 = vmax.f32 %v531, %v532
    %v534 = vrot.slane %v533, 2
    %v535 = vmax.f32 %v533, %v534
    %v536 = vrot.slane %v535, 1
    %v537 = vmax.f32 %v535, %v536
    %v538 = vsel %vm439, %v425, -inf
    %v539 = vrot.slane %v538, 4
    %v540 = vmax.f32 %v538, %v539
    %v541 = vrot.slane %v540, 2
    %v542 = vmax.f32 %v540, %v541
    %v543 = vrot.slane %v542, 1
    %v544 = vmax.f32 %v542, %v543
    %v545 = vsel %vm439, %v426, -inf
    %v546 = vrot.slane %v545, 4
    %v547 = vmax.f32 %v545, %v546
    %v548 = vrot.slane %v547, 2
    %v549 = vmax.f32 %v547, %v548
    %v550 = vrot.slane %v549, 1
    %v551 = vmax.f32 %v549, %v550
    %vm568 = vcmask 1041409
    %v569 = vsel %vm568, %v453, %v446
    %vm570 = vcmask 1042434
    %v571 = vsel %vm570, %v460, %v569
    %vm572 = vcmask 1043459
    %v573 = vsel %vm572, %v467, %v571
    %vm574 = vcmask 1044484
    %v575 = vsel %vm574, %v474, %v573
    %vm576 = vcmask 1045509
    %v577 = vsel %vm576, %v481, %v575
    %vm578 = vcmask 1046534
    %v579 = vsel %vm578, %v488, %v577
    %vm580 = vcmask 1047559
    %v581 = vsel %vm580, %v495, %v579
    %v582 = vsel %vm568, %v509, %v502
    %v583 = vsel %vm570, %v516, %v582
    %v584 = vsel %vm572, %v523, %v583
    %v585 = vsel %vm574, %v530, %v584
    %v586 = vsel %vm576, %v537, %v585
    %v587 = vsel %vm578, %v544, %v586
    %v588 = vsel %vm580, %v551, %v587
    %589 = vrot.lane.b32.xlu0 %v581, 120
    %v590 = vpop.permute.xlu0 %589
    %591 = vrot.lane.b32.xlu0 %v588, 120
    %v592 = vpop.permute.xlu0 %591
    %v597 = vrot.slane %v590, 1
    %v598 = vrot.slane %v590, 2
    %v599 = vrot.slane %v590, 3
    %v600 = vrot.slane %v590, 4
    %v601 = vrot.slane %v590, 5
    %v602 = vrot.slane %v590, 6
    %v603 = vrot.slane %v590, 7
    %v604 = vrot.slane %v592, 1
    %v605 = vrot.slane %v592, 2
    %v606 = vrot.slane %v592, 3
    %v607 = vrot.slane %v592, 4
    %v608 = vrot.slane %v592, 5
    %v609 = vrot.slane %v592, 6
    %v610 = vrot.slane %v592, 7
    %v627 = vmax.f32 %v446, %v590
    %v628 = vmax.f32 %v453, %v597
    %v629 = vmax.f32 %v460, %v598
    %v630 = vmax.f32 %v467, %v599
    %v631 = vmax.f32 %v474, %v600
    %v632 = vmax.f32 %v481, %v601
    %v633 = vmax.f32 %v488, %v602
    %v634 = vmax.f32 %v495, %v603
    %v635 = vmax.f32 %v502, %v592
    %v636 = vmax.f32 %v509, %v604
    %v637 = vmax.f32 %v516, %v605
    %v638 = vmax.f32 %v523, %v606
    %v639 = vmax.f32 %v530, %v607
    %v640 = vmax.f32 %v537, %v608
    %v641 = vmax.f32 %v544, %v609
    %v642 = vmax.f32 %v551, %v610
    %v659 = vrot.slane %v627, 7
    %v660 = vrot.slane %v628, 6
    %v661 = vsel %vm570, %v660, %v659
    %v662 = vrot.slane %v629, 5
    %v663 = vsel %vm572, %v662, %v661
    %v664 = vrot.slane %v630, 4
    %v665 = vsel %vm574, %v664, %v663
    %v666 = vrot.slane %v631, 3
    %v667 = vsel %vm576, %v666, %v665
    %v668 = vrot.slane %v632, 2
    %v669 = vsel %vm578, %v668, %v667
    %v670 = vrot.slane %v633, 1
    %v671 = vsel %vm580, %v670, %v669
    %v672 = vrot.slane %v635, 7
    %v673 = vrot.slane %v636, 6
    %v674 = vsel %vm570, %v673, %v672
    %v675 = vrot.slane %v637, 5
    %v676 = vsel %vm572, %v675, %v674
    %v677 = vrot.slane %v638, 4
    %v678 = vsel %vm574, %v677, %v676
    %v679 = vrot.slane %v639, 3
    %v680 = vsel %vm576, %v679, %v678
    %v681 = vrot.slane %v640, 2
    %v682 = vsel %vm578, %v681, %v680
    %v683 = vrot.slane %v641, 1
    %v684 = vsel %vm580, %v683, %v682
    %vm689 = vcmask 1040384
    %v690 = vsel %vm689, 0.0, %v671
    %v691 = vsel %vm689, 0.0, %v684
    %v692 = vsel %vm689, %v634, 0.0
    %v693 = vsel %vm689, %v642, 0.0
    %vm698 = vcmask 1046528
    %v699 = vrot.slane %v690, 1
    %v700 = vrot.slane %v692, 1
    %v701 = vsel %vm698, %v699, %v700
    %v702 = vrot.slane %v691, 1
    %v703 = vrot.slane %v693, 1
    %v704 = vsel %vm698, %v702, %v703
    %vm707 = vcmask 1045504
    %v708 = vrot.slane %v690, 2
    %v709 = vrot.slane %v692, 2
    %v710 = vsel %vm707, %v708, %v709
    %v711 = vrot.slane %v691, 2
    %v712 = vrot.slane %v693, 2
    %v713 = vsel %vm707, %v711, %v712
    %v716 = vpack.c.bf16 %v691, %v690
    %v717 = vpack.c.bf16 %v704, %v701
    %v718 = vpack.c.bf16 %v713, %v710
    %v719 = vld [vmem:[%s3] sm:$0xf]
    %v720 = vld [vmem:[%s3 + $0x4] sm:$0xf]
    %v721 = vld [vmem:[%s3 + $0x8] sm:$0xf]
    %v722 = vld [vmem:[%s3 + $0xc] sm:$0xf]
    %v723 = vld [vmem:[%s3 + $0x10] sm:$0xf]
    %v724 = vld [vmem:[%s3 + $0x14] sm:$0xf]
    %v725 = vld [vmem:[%s3 + $0x18] sm:$0xf]
    %v726 = vld [vmem:[%s3 + $0x1c] sm:$0xf]
    %v727 = vld [vmem:[%s3 + $0x20] sm:$0xf]
    %v728 = vld [vmem:[%s3 + $0x24] sm:$0xf]
    %v729 = vld [vmem:[%s3 + $0x28] sm:$0xf]
    %v730 = vld [vmem:[%s3 + $0x2c] sm:$0xf]
    %v731 = vld [vmem:[%s3 + $0x30] sm:$0xf]
    %v732 = vld [vmem:[%s3 + $0x34] sm:$0xf]
    %v733 = vld [vmem:[%s3 + $0x38] sm:$0xf]
    %v734 = vld [vmem:[%s3 + $0x3c] sm:$0xf]
    %v735 = vld [vmem:[%s3 + $0x40] sm:$0xf]
    %v736 = vld [vmem:[%s3 + $0x44] sm:$0xf]
    %v737 = vld [vmem:[%s3 + $0x48] sm:$0xf]
    %v738 = vld [vmem:[%s3 + $0x4c] sm:$0xf]
    %v739 = vld [vmem:[%s3 + $0x50] sm:$0xf]
    %v740 = vld [vmem:[%s3 + $0x54] sm:$0xf]
    %v741 = vld [vmem:[%s3 + $0x58] sm:$0xf]
    %v742 = vld [vmem:[%s3 + $0x5c] sm:$0xf]
    %v743 = vld [vmem:[%s3 + $0x60] sm:$0xf]
    %v744 = vld [vmem:[%s3 + $0x64] sm:$0xf]
    %v745 = vld [vmem:[%s3 + $0x68] sm:$0xf]
    %v746 = vld [vmem:[%s3 + $0x6c] sm:$0xf]
    %v747 = vld [vmem:[%s3 + $0x70] sm:$0xf]
    %v748 = vld [vmem:[%s3 + $0x74] sm:$0xf]
    %v749 = vld [vmem:[%s3 + $0x78] sm:$0xf]
    %v750 = vld [vmem:[%s3 + $0x7c] sm:$0xf]
    %v751 = vld [vmem:[%s3 + $0x80] sm:$0xf]
    %v752 = vld [vmem:[%s3 + $0x84] sm:$0xf]
    %v753 = vld [vmem:[%s3 + $0x88] sm:$0xf]
    %v754 = vld [vmem:[%s3 + $0x8c] sm:$0xf]
    %v755 = vld [vmem:[%s3 + $0x90] sm:$0xf]
    %v756 = vld [vmem:[%s3 + $0x94] sm:$0xf]
    %v757 = vld [vmem:[%s3 + $0x98] sm:$0xf]
    %v758 = vld [vmem:[%s3 + $0x9c] sm:$0xf]
    %v759 = vld [vmem:[%s3 + $0xa0] sm:$0xf]
    %v760 = vld [vmem:[%s3 + $0xa4] sm:$0xf]
    %v761 = vld [vmem:[%s3 + $0xa8] sm:$0xf]
    %v762 = vld [vmem:[%s3 + $0xac] sm:$0xf]
    %v763 = vld [vmem:[%s3 + $0xb0] sm:$0xf]
    %v764 = vld [vmem:[%s3 + $0xb4] sm:$0xf]
    %v765 = vld [vmem:[%s3 + $0xb8] sm:$0xf]
    %v766 = vld [vmem:[%s3 + $0xbc] sm:$0xf]
    %v767 = vld [vmem:[%s4] sm:$0x1]
    %v769 = vperm.slane %v767, 0
    %v819 = vunpack.c.l.b16 %v719
    %v820 = vunpack.c.l.b16 %v720
    %v821 = vunpack.c.l.b16 %v721
    %v822 = vunpack.c.l.b16 %v722
    %v823 = vunpack.c.l.b16 %v723
    %v824 = vunpack.c.l.b16 %v724
    %v825 = vunpack.c.l.b16 %v725
    %v826 = vunpack.c.l.b16 %v726
    %v827 = vunpack.c.l.b16 %v727
    %v828 = vunpack.c.l.b16 %v728
    %v829 = vunpack.c.l.b16 %v729
    %v830 = vunpack.c.l.b16 %v730
    %v831 = vunpack.c.l.b16 %v731
    %v832 = vunpack.c.l.b16 %v732
    %v833 = vunpack.c.l.b16 %v733
    %v834 = vunpack.c.l.b16 %v734
    %v835 = vunpack.c.l.b16 %v735
    %v836 = vunpack.c.l.b16 %v736
    %v837 = vunpack.c.l.b16 %v737
    %v838 = vunpack.c.l.b16 %v738
    %v839 = vunpack.c.l.b16 %v739
    %v840 = vunpack.c.l.b16 %v740
    %v841 = vunpack.c.l.b16 %v741
    %v842 = vunpack.c.l.b16 %v742
    %v843 = vunpack.c.l.b16 %v743
    %v844 = vunpack.c.l.b16 %v744
    %v845 = vunpack.c.l.b16 %v745
    %v846 = vunpack.c.l.b16 %v746
    %v847 = vunpack.c.l.b16 %v747
    %v848 = vunpack.c.l.b16 %v748
    %v849 = vunpack.c.l.b16 %v749
    %v850 = vunpack.c.l.b16 %v750
    %v851 = vunpack.c.l.b16 %v751
    %v852 = vunpack.c.l.b16 %v752
    %v853 = vunpack.c.l.b16 %v753
    %v854 = vunpack.c.l.b16 %v754
    %v855 = vunpack.c.l.b16 %v755
    %v856 = vunpack.c.l.b16 %v756
    %v857 = vunpack.c.l.b16 %v757
    %v858 = vunpack.c.l.b16 %v758
    %v859 = vunpack.c.l.b16 %v759
    %v860 = vunpack.c.l.b16 %v760
    %v861 = vunpack.c.l.b16 %v761
    %v862 = vunpack.c.l.b16 %v762
    %v863 = vunpack.c.l.b16 %v763
    %v864 = vunpack.c.l.b16 %v764
    %v865 = vunpack.c.l.b16 %v765
    %v866 = vunpack.c.l.b16 %v766
    %v867 = vpack.c.b16 %v820, %v819
    %v868 = vpack.c.b16 %v822, %v821
    %v869 = vpack.c.b16 %v824, %v823
    %v870 = vpack.c.b16 %v826, %v825
    %v871 = vpack.c.b16 %v828, %v827
    %v872 = vpack.c.b16 %v830, %v829
    %v873 = vpack.c.b16 %v832, %v831
    %v874 = vpack.c.b16 %v834, %v833
    %v875 = vpack.c.b16 %v836, %v835
    %v876 = vpack.c.b16 %v838, %v837
    %v877 = vpack.c.b16 %v840, %v839
    %v878 = vpack.c.b16 %v842, %v841
    %v879 = vpack.c.b16 %v844, %v843
    %v880 = vpack.c.b16 %v846, %v845
    %v881 = vpack.c.b16 %v848, %v847
    %v882 = vpack.c.b16 %v850, %v849
    %v883 = vpack.c.b16 %v852, %v851
    %v884 = vpack.c.b16 %v854, %v853
    %v885 = vpack.c.b16 %v856, %v855
    %v886 = vpack.c.b16 %v858, %v857
    %v887 = vpack.c.b16 %v860, %v859
    %v888 = vpack.c.b16 %v862, %v861
    %v889 = vpack.c.b16 %v864, %v863
    %v890 = vpack.c.b16 %v866, %v865
    %915 = vmatpush.bf16.msra.mxu0 %v874
    %916 = vmatpush.bf16.msra.mxu0 %v873
    %917 = vmatpush.bf16.msra.mxu0 %v872
    %918 = vmatpush.bf16.msra.mxu0 %v871
    %919 = vmatpush.bf16.msra.mxu0 %v870
    %920 = vmatpush.bf16.msra.mxu0 %v869
    %921 = vmatpush.bf16.msra.mxu0 %v868
    %922 = vmatpush.bf16.msra.mxu0 %v867
    %923 = vmatmul.bf16.gmra.mxu0 %v716
    %v924 = vpop.f32.mrf.mxu0
    %v925 = vadd.f32 %v769, %v924
    %v926 = vpop.f32.mrf.mxu0
    %v927 = vadd.f32 %v769, %v926
    %928 = vdwg.mxu0
    %929 = vmatpush.bf16.msra.mxu0 %v882
    %930 = vmatpush.bf16.msra.mxu0 %v881
    %931 = vmatpush.bf16.msra.mxu0 %v880
    %932 = vmatpush.bf16.msra.mxu0 %v879
    %933 = vmatpush.bf16.msra.mxu0 %v878
    %934 = vmatpush.bf16.msra.mxu0 %v877
    %935 = vmatpush.bf16.msra.mxu0 %v876
    %936 = vmatpush.bf16.msra.mxu0 %v875
    %937 = vmatmul.bf16.gmra.mxu0 %v717
    %v938 = vpop.f32.mrf.mxu0
    %v939 = vadd.f32 %v925, %v938
    %v940 = vpop.f32.mrf.mxu0
    %v941 = vadd.f32 %v927, %v940
    %942 = vdwg.mxu0
    %943 = vmatpush.bf16.msra.mxu0 %v890
    %944 = vmatpush.bf16.msra.mxu0 %v889
    %945 = vmatpush.bf16.msra.mxu0 %v888
    %946 = vmatpush.bf16.msra.mxu0 %v887
    %947 = vmatpush.bf16.msra.mxu0 %v886
    %948 = vmatpush.bf16.msra.mxu0 %v885
    %949 = vmatpush.bf16.msra.mxu0 %v884
    %950 = vmatpush.bf16.msra.mxu0 %v883
    %951 = vmatmul.bf16.gmra.mxu0 %v718
    %v952 = vpop.f32.mrf.mxu0
    %v953 = vadd.f32 %v939, %v952
    %v954 = vpop.f32.mrf.mxu0
    %v955 = vadd.f32 %v941, %v954
    %956 = vdwg.mxu0
    %v957 = vmax.f32 %v953, 0.0
    %v958 = vmax.f32 %v955, 0.0
    %v961 = vrot.slane %v957, 2
    %v962 = vrot.slane %v957, 4
    %v963 = vrot.slane %v957, 6
    %v964 = vrot.slane %v958, 2
    %v965 = vrot.slane %v958, 4
    %v966 = vrot.slane %v958, 6
    %v973 = vsel %vm439, %v957, -inf
    %v974 = vrot.slane %v973, 4
    %v975 = vmax.f32 %v973, %v974
    %v976 = vrot.slane %v975, 2
    %v977 = vmax.f32 %v975, %v976
    %v978 = vrot.slane %v977, 1
    %v979 = vmax.f32 %v977, %v978
    %v980 = vsel %vm439, %v961, -inf
    %v981 = vrot.slane %v980, 4
    %v982 = vmax.f32 %v980, %v981
    %v983 = vrot.slane %v982, 2
    %v984 = vmax.f32 %v982, %v983
    %v985 = vrot.slane %v984, 1
    %v986 = vmax.f32 %v984, %v985
    %v987 = vsel %vm439, %v962, -inf
    %v988 = vrot.slane %v987, 4
    %v989 = vmax.f32 %v987, %v988
    %v990 = vrot.slane %v989, 2
    %v991 = vmax.f32 %v989, %v990
    %v992 = vrot.slane %v991, 1
    %v993 = vmax.f32 %v991, %v992
    %v994 = vsel %vm439, %v963, -inf
    %v995 = vrot.slane %v994, 4
    %v996 = vmax.f32 %v994, %v995
    %v997 = vrot.slane %v996, 2
    %v998 = vmax.f32 %v996, %v997
    %v999 = vrot.slane %v998, 1
    %v1000 = vmax.f32 %v998, %v999
    %v1001 = vsel %vm439, %v958, -inf
    %v1002 = vrot.slane %v1001, 4
    %v1003 = vmax.f32 %v1001, %v1002
    %v1004 = vrot.slane %v1003, 2
    %v1005 = vmax.f32 %v1003, %v1004
    %v1006 = vrot.slane %v1005, 1
    %v1007 = vmax.f32 %v1005, %v1006
    %v1008 = vsel %vm439, %v964, -inf
    %v1009 = vrot.slane %v1008, 4
    %v1010 = vmax.f32 %v1008, %v1009
    %v1011 = vrot.slane %v1010, 2
    %v1012 = vmax.f32 %v1010, %v1011
    %v1013 = vrot.slane %v1012, 1
    %v1014 = vmax.f32 %v1012, %v1013
    %v1015 = vsel %vm439, %v965, -inf
    %v1016 = vrot.slane %v1015, 4
    %v1017 = vmax.f32 %v1015, %v1016
    %v1018 = vrot.slane %v1017, 2
    %v1019 = vmax.f32 %v1017, %v1018
    %v1020 = vrot.slane %v1019, 1
    %v1021 = vmax.f32 %v1019, %v1020
    %v1022 = vsel %vm439, %v966, -inf
    %v1023 = vrot.slane %v1022, 4
    %v1024 = vmax.f32 %v1022, %v1023
    %v1025 = vrot.slane %v1024, 2
    %v1026 = vmax.f32 %v1024, %v1025
    %v1027 = vrot.slane %v1026, 1
    %v1028 = vmax.f32 %v1026, %v1027
    %v1037 = vsel %vm568, %v986, %v979
    %v1038 = vsel %vm570, %v993, %v1037
    %v1039 = vsel %vm572, %v1000, %v1038
    %v1040 = vsel %vm574, %v1007, %v1039
    %v1041 = vsel %vm576, %v1014, %v1040
    %v1042 = vsel %vm578, %v1021, %v1041
    %v1043 = vsel %vm580, %v1028, %v1042
    %1044 = vrot.lane.b32.xlu0 %v1043, 112
    %v1045 = vpop.permute.xlu0 %1044
    %v1048 = vrot.slane %v1045, 1
    %v1049 = vrot.slane %v1045, 2
    %v1050 = vrot.slane %v1045, 3
    %v1051 = vrot.slane %v1045, 4
    %v1052 = vrot.slane %v1045, 5
    %v1053 = vrot.slane %v1045, 6
    %v1054 = vrot.slane %v1045, 7
    %v1063 = vmax.f32 %v979, %v1045
    %v1064 = vmax.f32 %v986, %v1048
    %v1065 = vmax.f32 %v993, %v1049
    %v1066 = vmax.f32 %v1000, %v1050
    %v1067 = vmax.f32 %v1007, %v1051
    %v1068 = vmax.f32 %v1014, %v1052
    %v1069 = vmax.f32 %v1021, %v1053
    %v1070 = vmax.f32 %v1028, %v1054
    %v1079 = vrot.slane %v1064, 7
    %v1080 = vsel %vm568, %v1079, %v1063
    %v1081 = vrot.slane %v1065, 6
    %v1082 = vsel %vm570, %v1081, %v1080
    %v1083 = vrot.slane %v1066, 5
    %v1084 = vsel %vm572, %v1083, %v1082
    %v1085 = vrot.slane %v1068, 7
    %v1086 = vsel %vm568, %v1085, %v1067
    %v1087 = vrot.slane %v1069, 6
    %v1088 = vsel %vm570, %v1087, %v1086
    %v1089 = vrot.slane %v1070, 5
    %v1090 = vsel %vm572, %v1089, %v1088
    %vm1093 = vcmask 1043456
    %v1094 = vsel %vm1093, %v1084, 0.0
    %v1095 = vrot.slane %v1094, 4
    %v1096 = vadd.f32 %v1094, %v1095
    %v1097 = vrot.slane %v1096, 2
    %v1098 = vadd.f32 %v1096, %v1097
    %v1099 = vrot.slane %v1098, 1
    %v1100 = vadd.f32 %v1098, %v1099
    %v1101 = vsel %vm1093, %v1090, 0.0
    %v1102 = vrot.slane %v1101, 4
    %v1103 = vadd.f32 %v1101, %v1102
    %v1104 = vrot.slane %v1103, 2
    %v1105 = vadd.f32 %v1103, %v1104
    %v1106 = vrot.slane %v1105, 1
    %v1107 = vadd.f32 %v1105, %v1106
    %v1108 = vld [vmem:[%s11] sm:$0xff]
    %v1109 = vld [vmem:[%s11 + $0x8] sm:$0xff]
    %v1110 = vld [vmem:[%s11 + $0x10] sm:$0xff]
    %v1111 = vld [vmem:[%s11 + $0x18] sm:$0xff]
    %v1112 = vld [vmem:[%s11 + $0x20] sm:$0xff]
    %v1113 = vld [vmem:[%s11 + $0x28] sm:$0xff]
    %v1114 = vld [vmem:[%s11 + $0x30] sm:$0xff]
    %v1115 = vld [vmem:[%s11 + $0x38] sm:$0xff]
    %v1116 = vld [vmem:[%s11 + $0x40] sm:$0xff]
    %v1117 = vld [vmem:[%s11 + $0x48] sm:$0xff]
    %v1118 = vld [vmem:[%s11 + $0x50] sm:$0xff]
    %v1119 = vld [vmem:[%s11 + $0x58] sm:$0xff]
    %v1120 = vld [vmem:[%s11 + $0x60] sm:$0xff]
    %v1121 = vld [vmem:[%s11 + $0x68] sm:$0xff]
    %v1122 = vld [vmem:[%s11 + $0x70] sm:$0xff]
    %v1123 = vld [vmem:[%s11 + $0x78] sm:$0xff]
    %v1126 = vrot.slane %v1107, 7
    %v1127 = vsel %vm568, %v1126, %v1100
    %1129 = vmatpush.msra.mxu0 %v1123
    %1130 = vmatpush.msra.mxu0 %v1122
    %1131 = vmatpush.msra.mxu0 %v1121
    %1132 = vmatpush.msra.mxu0 %v1120
    %1133 = vmatpush.msra.mxu0 %v1119
    %1134 = vmatpush.msra.mxu0 %v1118
    %1135 = vmatpush.msra.mxu0 %v1117
    %1136 = vmatpush.msra.mxu0 %v1116
    %1137 = vmatpush.msra.mxu0 %v1115
    %1138 = vmatpush.msra.mxu0 %v1114
    %1139 = vmatpush.msra.mxu0 %v1113
    %1140 = vmatpush.msra.mxu0 %v1112
    %1141 = vmatpush.msra.mxu0 %v1111
    %1142 = vmatpush.msra.mxu0 %v1110
    %1143 = vmatpush.msra.mxu0 %v1109
    %1144 = vmatpush.msra.mxu0 %v1108
    %1145 = vmatmul.f32.gmra.mxu0 %v1127
    %v1146 = vpop.f32.mrf.mxu0
    %v1147 = vadd.f32 0.0, %v1146
    %1148 = vdwg.mxu0
    %vm1149 = vcmask 123904
    %1150 = vst.msk [vmem:[#allocation4] sm:$0x3] %vm1149, %v1147
    %v1151 = vrot.slane %v1067, 7
    %v1152 = vsel %vm568, %v1151, %v1063
    %v1154 = vsel %vm568, %v1085, %v1064
    %v1156 = vrot.slane %v1069, 7
    %v1157 = vsel %vm568, %v1156, %v1065
    %v1159 = vrot.slane %v1070, 7
    %v1160 = vsel %vm568, %v1159, %v1066
    %v1162 = vpack.c.bf16 %v1152, %v1152
    %v1163 = vpack.c.bf16 %v1154, %v1154
    %v1164 = vpack.c.bf16 %v1157, %v1157
    %v1165 = vpack.c.bf16 %v1160, %v1160
    %v1166 = vld [vmem:[%s5] sm:$0xf]
    %v1167 = vld [vmem:[%s5 + $0x4] sm:$0xf]
    %v1168 = vld [vmem:[%s5 + $0x8] sm:$0xf]
    %v1169 = vld [vmem:[%s5 + $0xc] sm:$0xf]
    %v1170 = vld [vmem:[%s5 + $0x10] sm:$0xf]
    %v1171 = vld [vmem:[%s5 + $0x14] sm:$0xf]
    %v1172 = vld [vmem:[%s5 + $0x18] sm:$0xf]
    %v1173 = vld [vmem:[%s5 + $0x1c] sm:$0xf]
    %v1174 = vld [vmem:[%s5 + $0x20] sm:$0xf]
    %v1175 = vld [vmem:[%s5 + $0x24] sm:$0xf]
    %v1176 = vld [vmem:[%s5 + $0x28] sm:$0xf]
    %v1177 = vld [vmem:[%s5 + $0x2c] sm:$0xf]
    %v1178 = vld [vmem:[%s5 + $0x30] sm:$0xf]
    %v1179 = vld [vmem:[%s5 + $0x34] sm:$0xf]
    %v1180 = vld [vmem:[%s5 + $0x38] sm:$0xf]
    %v1181 = vld [vmem:[%s5 + $0x3c] sm:$0xf]
    %v1182 = vld [vmem:[%s5 + $0x40] sm:$0xf]
    %v1183 = vld [vmem:[%s5 + $0x44] sm:$0xf]
    %v1184 = vld [vmem:[%s5 + $0x48] sm:$0xf]
    %v1185 = vld [vmem:[%s5 + $0x4c] sm:$0xf]
    %v1186 = vld [vmem:[%s5 + $0x50] sm:$0xf]
    %v1187 = vld [vmem:[%s5 + $0x54] sm:$0xf]
    %v1188 = vld [vmem:[%s5 + $0x58] sm:$0xf]
    %v1189 = vld [vmem:[%s5 + $0x5c] sm:$0xf]
    %v1190 = vld [vmem:[%s5 + $0x60] sm:$0xf]
    %v1191 = vld [vmem:[%s5 + $0x64] sm:$0xf]
    %v1192 = vld [vmem:[%s5 + $0x68] sm:$0xf]
    %v1193 = vld [vmem:[%s5 + $0x6c] sm:$0xf]
    %v1194 = vld [vmem:[%s5 + $0x70] sm:$0xf]
    %v1195 = vld [vmem:[%s5 + $0x74] sm:$0xf]
    %v1196 = vld [vmem:[%s5 + $0x78] sm:$0xf]
    %v1197 = vld [vmem:[%s5 + $0x7c] sm:$0xf]
    %v1198 = vld [vmem:[%s5 + $0x80] sm:$0xf]
    %v1199 = vld [vmem:[%s5 + $0x84] sm:$0xf]
    %v1200 = vld [vmem:[%s5 + $0x88] sm:$0xf]
    %v1201 = vld [vmem:[%s5 + $0x8c] sm:$0xf]
    %v1202 = vld [vmem:[%s5 + $0x90] sm:$0xf]
    %v1203 = vld [vmem:[%s5 + $0x94] sm:$0xf]
    %v1204 = vld [vmem:[%s5 + $0x98] sm:$0xf]
    %v1205 = vld [vmem:[%s5 + $0x9c] sm:$0xf]
    %v1206 = vld [vmem:[%s5 + $0xa0] sm:$0xf]
    %v1207 = vld [vmem:[%s5 + $0xa4] sm:$0xf]
    %v1208 = vld [vmem:[%s5 + $0xa8] sm:$0xf]
    %v1209 = vld [vmem:[%s5 + $0xac] sm:$0xf]
    %v1210 = vld [vmem:[%s5 + $0xb0] sm:$0xf]
    %v1211 = vld [vmem:[%s5 + $0xb4] sm:$0xf]
    %v1212 = vld [vmem:[%s5 + $0xb8] sm:$0xf]
    %v1213 = vld [vmem:[%s5 + $0xbc] sm:$0xf]
    %v1214 = vld [vmem:[%s5 + $0xc0] sm:$0xf]
    %v1215 = vld [vmem:[%s5 + $0xc4] sm:$0xf]
    %v1216 = vld [vmem:[%s5 + $0xc8] sm:$0xf]
    %v1217 = vld [vmem:[%s5 + $0xcc] sm:$0xf]
    %v1218 = vld [vmem:[%s5 + $0xd0] sm:$0xf]
    %v1219 = vld [vmem:[%s5 + $0xd4] sm:$0xf]
    %v1220 = vld [vmem:[%s5 + $0xd8] sm:$0xf]
    %v1221 = vld [vmem:[%s5 + $0xdc] sm:$0xf]
    %v1222 = vld [vmem:[%s5 + $0xe0] sm:$0xf]
    %v1223 = vld [vmem:[%s5 + $0xe4] sm:$0xf]
    %v1224 = vld [vmem:[%s5 + $0xe8] sm:$0xf]
    %v1225 = vld [vmem:[%s5 + $0xec] sm:$0xf]
    %v1226 = vld [vmem:[%s5 + $0xf0] sm:$0xf]
    %v1227 = vld [vmem:[%s5 + $0xf4] sm:$0xf]
    %v1228 = vld [vmem:[%s5 + $0xf8] sm:$0xf]
    %v1229 = vld [vmem:[%s5 + $0xfc] sm:$0xf]
    %v1230 = vld [vmem:[%s6] sm:$0x1]
    %v1232 = vperm.slane %v1230, 0
    %v1298 = vunpack.c.l.b16 %v1166
    %v1299 = vunpack.c.l.b16 %v1167
    %v1300 = vunpack.c.l.b16 %v1168
    %v1301 = vunpack.c.l.b16 %v1169
    %v1302 = vunpack.c.l.b16 %v1170
    %v1303 = vunpack.c.l.b16 %v1171
    %v1304 = vunpack.c.l.b16 %v1172
    %v1305 = vunpack.c.l.b16 %v1173
    %v1306 = vunpack.c.l.b16 %v1174
    %v1307 = vunpack.c.l.b16 %v1175
    %v1308 = vunpack.c.l.b16 %v1176
    %v1309 = vunpack.c.l.b16 %v1177
    %v1310 = vunpack.c.l.b16 %v1178
    %v1311 = vunpack.c.l.b16 %v1179
    %v1312 = vunpack.c.l.b16 %v1180
    %v1313 = vunpack.c.l.b16 %v1181
    %v1314 = vunpack.c.l.b16 %v1182
    %v1315 = vunpack.c.l.b16 %v1183
    %v1316 = vunpack.c.l.b16 %v1184
    %v1317 = vunpack.c.l.b16 %v1185
    %v1318 = vunpack.c.l.b16 %v1186
    %v1319 = vunpack.c.l.b16 %v1187
    %v1320 = vunpack.c.l.b16 %v1188
    %v1321 = vunpack.c.l.b16 %v1189
    %v1322 = vunpack.c.l.b16 %v1190
    %v1323 = vunpack.c.l.b16 %v1191
    %v1324 = vunpack.c.l.b16 %v1192
    %v1325 = vunpack.c.l.b16 %v1193
    %v1326 = vunpack.c.l.b16 %v1194
    %v1327 = vunpack.c.l.b16 %v1195
    %v1328 = vunpack.c.l.b16 %v1196
    %v1329 = vunpack.c.l.b16 %v1197
    %v1330 = vunpack.c.l.b16 %v1198
    %v1331 = vunpack.c.l.b16 %v1199
    %v1332 = vunpack.c.l.b16 %v1200
    %v1333 = vunpack.c.l.b16 %v1201
    %v1334 = vunpack.c.l.b16 %v1202
    %v1335 = vunpack.c.l.b16 %v1203
    %v1336 = vunpack.c.l.b16 %v1204
    %v1337 = vunpack.c.l.b16 %v1205
    %v1338 = vunpack.c.l.b16 %v1206
    %v1339 = vunpack.c.l.b16 %v1207
    %v1340 = vunpack.c.l.b16 %v1208
    %v1341 = vunpack.c.l.b16 %v1209
    %v1342 = vunpack.c.l.b16 %v1210
    %v1343 = vunpack.c.l.b16 %v1211
    %v1344 = vunpack.c.l.b16 %v1212
    %v1345 = vunpack.c.l.b16 %v1213
    %v1346 = vunpack.c.l.b16 %v1214
    %v1347 = vunpack.c.l.b16 %v1215
    %v1348 = vunpack.c.l.b16 %v1216
    %v1349 = vunpack.c.l.b16 %v1217
    %v1350 = vunpack.c.l.b16 %v1218
    %v1351 = vunpack.c.l.b16 %v1219
    %v1352 = vunpack.c.l.b16 %v1220
    %v1353 = vunpack.c.l.b16 %v1221
    %v1354 = vunpack.c.l.b16 %v1222
    %v1355 = vunpack.c.l.b16 %v1223
    %v1356 = vunpack.c.l.b16 %v1224
    %v1357 = vunpack.c.l.b16 %v1225
    %v1358 = vunpack.c.l.b16 %v1226
    %v1359 = vunpack.c.l.b16 %v1227
    %v1360 = vunpack.c.l.b16 %v1228
    %v1361 = vunpack.c.l.b16 %v1229
    %v1362 = vpack.c.b16 %v1299, %v1298
    %v1363 = vpack.c.b16 %v1301, %v1300
    %v1364 = vpack.c.b16 %v1303, %v1302
    %v1365 = vpack.c.b16 %v1305, %v1304
    %v1366 = vpack.c.b16 %v1307, %v1306
    %v1367 = vpack.c.b16 %v1309, %v1308
    %v1368 = vpack.c.b16 %v1311, %v1310
    %v1369 = vpack.c.b16 %v1313, %v1312
    %v1370 = vpack.c.b16 %v1315, %v1314
    %v1371 = vpack.c.b16 %v1317, %v1316
    %v1372 = vpack.c.b16 %v1319, %v1318
    %v1373 = vpack.c.b16 %v1321, %v1320
    %v1374 = vpack.c.b16 %v1323, %v1322
    %v1375 = vpack.c.b16 %v1325, %v1324
    %v1376 = vpack.c.b16 %v1327, %v1326
    %v1377 = vpack.c.b16 %v1329, %v1328
    %v1378 = vpack.c.b16 %v1331, %v1330
    %v1379 = vpack.c.b16 %v1333, %v1332
    %v1380 = vpack.c.b16 %v1335, %v1334
    %v1381 = vpack.c.b16 %v1337, %v1336
    %v1382 = vpack.c.b16 %v1339, %v1338
    %v1383 = vpack.c.b16 %v1341, %v1340
    %v1384 = vpack.c.b16 %v1343, %v1342
    %v1385 = vpack.c.b16 %v1345, %v1344
    %v1386 = vpack.c.b16 %v1347, %v1346
    %v1387 = vpack.c.b16 %v1349, %v1348
    %v1388 = vpack.c.b16 %v1351, %v1350
    %v1389 = vpack.c.b16 %v1353, %v1352
    %v1390 = vpack.c.b16 %v1355, %v1354
    %v1391 = vpack.c.b16 %v1357, %v1356
    %v1392 = vpack.c.b16 %v1359, %v1358
    %v1393 = vpack.c.b16 %v1361, %v1360
    %1426 = vmatpush.bf16.msra.mxu0 %v1369
    %1427 = vmatpush.bf16.msra.mxu0 %v1368
    %1428 = vmatpush.bf16.msra.mxu0 %v1367
    %1429 = vmatpush.bf16.msra.mxu0 %v1366
    %1430 = vmatpush.bf16.msra.mxu0 %v1365
    %1431 = vmatpush.bf16.msra.mxu0 %v1364
    %1432 = vmatpush.bf16.msra.mxu0 %v1363
    %1433 = vmatpush.bf16.msra.mxu0 %v1362
    %1434 = vmatmul.bf16.gmra.mxu0 %v1162
    %v1435 = vpop.f32.mrf.mxu0
    %v1436 = vadd.f32 %v1232, %v1435
    %v1437 = vpop.f32.mrf.mxu0
    %1438 = vdwg.mxu0
    %1439 = vmatpush.bf16.msra.mxu0 %v1377
    %1440 = vmatpush.bf16.msra.mxu0 %v1376
    %1441 = vmatpush.bf16.msra.mxu0 %v1375
    %1442 = vmatpush.bf16.msra.mxu0 %v1374
    %1443 = vmatpush.bf16.msra.mxu0 %v1373
    %1444 = vmatpush.bf16.msra.mxu0 %v1372
    %1445 = vmatpush.bf16.msra.mxu0 %v1371
    %1446 = vmatpush.bf16.msra.mxu0 %v1370
    %1447 = vmatmul.bf16.gmra.mxu0 %v1163
    %v1448 = vpop.f32.mrf.mxu0
    %v1449 = vadd.f32 %v1436, %v1448
    %v1450 = vpop.f32.mrf.mxu0
    %1451 = vdwg.mxu0
    %1452 = vmatpush.bf16.msra.mxu0 %v1385
    %1453 = vmatpush.bf16.msra.mxu0 %v1384
    %1454 = vmatpush.bf16.msra.mxu0 %v1383
    %1455 = vmatpush.bf16.msra.mxu0 %v1382
    %1456 = vmatpush.bf16.msra.mxu0 %v1381
    %1457 = vmatpush.bf16.msra.mxu0 %v1380
    %1458 = vmatpush.bf16.msra.mxu0 %v1379
    %1459 = vmatpush.bf16.msra.mxu0 %v1378
    %1460 = vmatmul.bf16.gmra.mxu0 %v1164
    %v1461 = vpop.f32.mrf.mxu0
    %v1462 = vadd.f32 %v1449, %v1461
    %v1463 = vpop.f32.mrf.mxu0
    %1464 = vdwg.mxu0
    %1465 = vmatpush.bf16.msra.mxu0 %v1393
    %1466 = vmatpush.bf16.msra.mxu0 %v1392
    %1467 = vmatpush.bf16.msra.mxu0 %v1391
    %1468 = vmatpush.bf16.msra.mxu0 %v1390
    %1469 = vmatpush.bf16.msra.mxu0 %v1389
    %1470 = vmatpush.bf16.msra.mxu0 %v1388
    %1471 = vmatpush.bf16.msra.mxu0 %v1387
    %1472 = vmatpush.bf16.msra.mxu0 %v1386
    %1473 = vmatmul.bf16.gmra.mxu0 %v1165
    %v1474 = vpop.f32.mrf.mxu0
    %v1475 = vadd.f32 %v1462, %v1474
    %v1476 = vpop.f32.mrf.mxu0
    %1477 = vdwg.mxu0
    %v1478 = vmax.f32 %v1475, 0.0
    %v1479 = vpack.c.bf16 %v1478, %v1478
    %v1480 = vld [vmem:[%s7] sm:$0xf]
    %v1481 = vld [vmem:[%s7 + $0x4] sm:$0xf]
    %v1482 = vld [vmem:[%s7 + $0x8] sm:$0xf]
    %v1483 = vld [vmem:[%s7 + $0xc] sm:$0xf]
    %v1484 = vld [vmem:[%s7 + $0x10] sm:$0xf]
    %v1485 = vld [vmem:[%s7 + $0x14] sm:$0xf]
    %v1486 = vld [vmem:[%s7 + $0x18] sm:$0xf]
    %v1487 = vld [vmem:[%s7 + $0x1c] sm:$0xf]
    %v1488 = vld [vmem:[%s8] sm:$0x1]
    %v1490 = vperm.slane %v1488, 0
    %v1500 = vunpack.c.l.b16 %v1480
    %v1501 = vunpack.c.l.b16 %v1481
    %v1502 = vunpack.c.l.b16 %v1482
    %v1503 = vunpack.c.l.b16 %v1483
    %v1504 = vunpack.c.l.b16 %v1484
    %v1505 = vunpack.c.l.b16 %v1485
    %v1506 = vunpack.c.l.b16 %v1486
    %v1507 = vunpack.c.l.b16 %v1487
    %v1508 = vpack.c.b16 %v1501, %v1500
    %v1509 = vpack.c.b16 %v1503, %v1502
    %v1510 = vpack.c.b16 %v1505, %v1504
    %v1511 = vpack.c.b16 %v1507, %v1506
    %vm1516 = vcmask 523264
    %v1518 = vsel %vm1516, %v1479, 0
    %1520 = vmatpush.bf16.msra.mxu0 0
    %1521 = vmatpush.bf16.msra.mxu0 0
    %1522 = vmatpush.bf16.msra.mxu0 0
    %1523 = vmatpush.bf16.msra.mxu0 0
    %1524 = vmatpush.bf16.msra.mxu0 %v1511
    %1525 = vmatpush.bf16.msra.mxu0 %v1510
    %1526 = vmatpush.bf16.msra.mxu0 %v1509
    %1527 = vmatpush.bf16.msra.mxu0 %v1508
    %1528 = vmatmul.bf16.gmra.mxu0 %v1518
    %v1529 = vpop.f32.mrf.mxu0
    %v1530 = vadd.f32 %v1490, %v1529
    %v1531 = vpop.f32.mrf.mxu0
    %1532 = vdwg.mxu0
    %v1533 = vmax.f32 %v1530, 0.0
    %v1534 = vpack.c.bf16 %v1533, %v1533
    %v1535 = vld [vmem:[%s9] sm:$0xf]
    %v1536 = vld [vmem:[%s9 + $0x4] sm:$0xf]
    %v1537 = vld [vmem:[%s9 + $0x8] sm:$0xf]
    %v1538 = vld [vmem:[%s9 + $0xc] sm:$0xf]
    %v1539 = vld [vmem:[%s10] sm:$0x1]
    %v1541 = vperm.slane %v1539, 0
    %v1547 = vunpack.c.l.b16 %v1535
    %v1548 = vunpack.c.l.b16 %v1536
    %v1549 = vunpack.c.l.b16 %v1537
    %v1550 = vunpack.c.l.b16 %v1538
    %v1551 = vpack.c.b16 %v1548, %v1547
    %v1552 = vpack.c.b16 %v1550, %v1549
    %vm1555 = vcmask 261120
    %v1557 = vsel %vm1555, %v1534, 0
    %1559 = vmatpush.bf16.msra.mxu0 0
    %1560 = vmatpush.bf16.msra.mxu0 0
    %1561 = vmatpush.bf16.msra.mxu0 0
    %1562 = vmatpush.bf16.msra.mxu0 0
    %1563 = vmatpush.bf16.msra.mxu0 0
    %1564 = vmatpush.bf16.msra.mxu0 0
    %1565 = vmatpush.bf16.msra.mxu0 %v1552
    %1566 = vmatpush.bf16.msra.mxu0 %v1551
    %1567 = vmatmul.bf16.gmra.mxu0 %v1557
    %v1568 = vpop.f32.mrf.mxu0
    %v1569 = vadd.f32 %v1541, %v1568
    %v1570 = vpop.f32.mrf.mxu0
    %1571 = vdwg.mxu0
    %vm1572 = vcmask 74752
    %1573 = vst.msk [vmem:[#allocation2] sm:$0x3] %vm1572, %v1569
    // Predicated region
    $region50: #{vgg_forward.1} parent=1 // pred_check
      _
    $region51: #{vgg_forward.1} parent=1 // pred_check_branch
      %1575 = sbr.rel (0) target = $region53
    $region52: #{vgg_forward.1} parent=1 // pred_region
      %1577 = vsyncadd [#allocation3], 0
      %s1579 = sshll.u32 [#allocation2], 4
      %s1580 = int_to_ptr.vmem [resolvable:$true] %s1579
      %s1581 = sshll.u32 %s12, 4
      %s1582 = int_to_ptr.hbm [resolvable:$true] %s1581
      %1584 = dma.vmem_to_hbm [thread:$0]  %s1580, 32, %s1582, [#allocation3]
    $region53: #{vgg_forward.1} parent=1 // pred_fallthru
      _
    // Predicated region
    $region54: #{vgg_forward.1} parent=1 // pred_check
      _
    $region55: #{vgg_forward.1} parent=1 // pred_check_branch
      %1586 = sbr.rel (0) target = $region57
    $region56: #{vgg_forward.1} parent=1 // pred_region
      %1588 = vsyncadd [#allocation5], 0
      %s1590 = sshll.u32 [#allocation4], 4
      %s1591 = int_to_ptr.vmem [resolvable:$true] %s1590
      %s1592 = sshll.u32 %s13, 4
      %s1593 = int_to_ptr.hbm [resolvable:$true] %s1592
      %1595 = dma.vmem_to_hbm [thread:$0]  %s1591, 32, %s1593, [#allocation5]
    $region57: #{vgg_forward.1} parent=1 // pred_fallthru
      _
    // Predicated region
    $region58: #{vgg_forward.1} parent=1 // pred_check
      _
    $region59: #{vgg_forward.1} parent=1 // pred_check_branch
      %1597 = sbr.rel (0) target = $region61
    $region60: #{vgg_forward.1} parent=1 // pred_region
      %1599 = dma.done [#allocation3], 32
    $region61: #{vgg_forward.1} parent=1 // pred_fallthru
      _
    // Predicated region
    $region62: #{vgg_forward.1} parent=1 // pred_check
      _
    $region63: #{vgg_forward.1} parent=1 // pred_check_branch
      %1601 = sbr.rel (0) target = $region65
    $region64: #{vgg_forward.1} parent=1 // pred_region
      %1603 = dma.done [#allocation5], 32
    $region65: #{vgg_forward.1} parent=1 // pred_fallthru
      _
    %1604 = vsyncpa [#allocation3], 1
    %1605 = vsyncpa [#allocation5], 1

</llo_original>
